<compile_context>
chip_gen: v7x
topology: tpu7x:2x2x1
jax: 0.10.0
libtpu: 0.0.40
codegen_flags: <defaults>
</compile_context>

<pallas_src>
import math

import jax
import jax.numpy as jnp
from jax.experimental import pallas as pl
from jax.experimental.pallas import tpu as pltpu

# ----------------------------- configuration --------------------------------
BATCH = 2
SEQ = 16
HIDDEN = 32
NUM_HEADS = 2
HEAD_DIM = HIDDEN // NUM_HEADS
INTERMEDIATE = 64
NUM_LAYERS = 2
VOCAB_BASE = 36                 # "pretrained" vocab
VOCAB = VOCAB_BASE + 4          # + ['[E1]', '[/E1]', '[E2]', '[/E2]']
E1_TOKEN_ID = VOCAB_BASE + 0    # id of '[E1]'
E2_TOKEN_ID = VOCAB_BASE + 2    # id of '[E2]'
SUBTASK = "6.2.2"               # anything != '6.2.1' -> 18 classes
NUM_CLASSES = 1 if SUBTASK == "6.2.1" else 18
LANE = 128
CLASS_PAD = LANE                # lane-dense classifier output, sliced to NUM_CLASSES
LN_EPS = 1e-12
MXU_DTYPE = jnp.bfloat16        # MXU operand dtype (accumulation stays f32)

# slab layout constants
W_ROWS_PER_LAYER = HIDDEN + HIDDEN + HIDDEN + INTERMEDIATE      # wqkv, wo, w1, w2
W_SLAB_ROWS = NUM_LAYERS * W_ROWS_PER_LAYER + 2 * HIDDEN        # + classifier (2H, 128)
BIAS_ROWS_PER_LAYER = 8          # bqkv, bo, ln1_g, ln1_b, b1, b2, ln2_g, ln2_b
B_SLAB_ROWS = NUM_LAYERS * BIAS_ROWS_PER_LAYER + 8               # + emb_ln_g/b, bc (padded)


# ------------------------------ kernel helpers -------------------------------
def _layer_norm(x, g, b):
    mu = jnp.mean(x, axis=-1, keepdims=True)
    var = jnp.mean(jnp.square(x - mu), axis=-1, keepdims=True)
    return (x - mu) * jax.lax.rsqrt(var + LN_EPS) * g + b


# ------------------------------ fused Pallas kernel ---------------------------
def _fused_forward_kernel(e1p_ref, e2p_ref,          # scalar prefetch (SMEM)
                          x_ref, bias_ref, w_ref, b_ref,
                          out_ref):
    M = BATCH * SEQ
    H, HD, I = HIDDEN, HEAD_DIM, INTERMEDIATE
    scale = 1.0 / math.sqrt(HD)

    attn_bias = bias_ref[...]                         # (M, M) block-diag + padding bias

    # embedding LayerNorm on the batch-folded activation (M, H)
    gb = NUM_LAYERS * BIAS_ROWS_PER_LAYER
    emb_g = b_ref[gb + 0:gb + 1, 0:H]
    emb_b = b_ref[gb + 1:gb + 2, 0:H]
    x2 = _layer_norm(x_ref[...], emb_g, emb_b)        # (M, H) f32

    for l in range(NUM_LAYERS):                       # static unrolled layer loop
        wr = l * W_ROWS_PER_LAYER
        br = l * BIAS_ROWS_PER_LAYER
        x2_bf = x2.astype(MXU_DTYPE)                  # single cast per consumer chain

        # ---- fused QKV projection: one (M, H) @ (H, 3H) MXU push ----
        wqkv = w_ref[wr:wr + H, 0:3 * H]
        bqkv = b_ref[br + 0:br + 1, 0:3 * H]
        qkv = jnp.dot(x2_bf, wqkv, preferred_element_type=jnp.float32) + bqkv
        qkv_bf = qkv.astype(MXU_DTYPE)                # one cast reused for q/k/v slices

        # ---- batched (block-diagonal) attention, one softmax per head ----
        ctx_heads = []
        for h in range(NUM_HEADS):
            q = qkv_bf[:, h * HD:(h + 1) * HD]                  # (M, HD)
            k = qkv_bf[:, H + h * HD:H + (h + 1) * HD]          # (M, HD)
            v = qkv_bf[:, 2 * H + h * HD:2 * H + (h + 1) * HD]  # (M, HD)
            s = jax.lax.dot_general(q, k, (((1,), (1,)), ((), ())),
                                    preferred_element_type=jnp.float32)   # (M, M)
            s = s * scale + attn_bias
            s = s - jnp.max(s, axis=-1, keepdims=True)
            p = jnp.exp(s)
            p = p * pl.reciprocal(jnp.sum(p, axis=-1, keepdims=True), approx=True)
            ctx_heads.append(jnp.dot(p.astype(MXU_DTYPE), v,
                                     preferred_element_type=jnp.float32))  # (M, HD)
        ctx = jnp.concatenate(ctx_heads, axis=-1).astype(MXU_DTYPE)        # (M, H)

        # ---- single fused output projection ----
        wo = w_ref[wr + H:wr + 2 * H, 0:H]
        bo = b_ref[br + 1:br + 2, 0:H]
        attn = jnp.dot(ctx, wo, preferred_element_type=jnp.float32) + bo

        ln1g = b_ref[br + 2:br + 3, 0:H]
        ln1b = b_ref[br + 3:br + 4, 0:H]
        h1 = _layer_norm(x2 + attn, ln1g, ln1b)
        h1_bf = h1.astype(MXU_DTYPE)

        # ---- feed-forward ----
        w1 = w_ref[wr + 2 * H:wr + 3 * H, 0:I]
        b1 = b_ref[br + 4:br + 5, 0:I]
        ff = jnp.dot(h1_bf, w1, preferred_element_type=jnp.float32) + b1
        ff = jax.nn.gelu(ff, approximate=True)  # TODO(synk): HF BERT uses exact erf-GELU; tanh approx used here
        w2 = w_ref[wr + 3 * H:wr + 3 * H + I, 0:H]
        b2 = b_ref[br + 5:br + 6, 0:H]
        ff2 = jnp.dot(ff.astype(MXU_DTYPE), w2, preferred_element_type=jnp.float32) + b2

        ln2g = b_ref[br + 6:br + 7, 0:H]
        ln2b = b_ref[br + 7:br + 8, 0:H]
        x2 = _layer_norm(h1 + ff2, ln2g, ln2b)

    # ---- entity-start gather via one-hot selection matmul (no VMEM round-trip) ----
    x2_bf = x2.astype(MXU_DTYPE)
    row_ids = jax.lax.broadcasted_iota(jnp.int32, (2 * BATCH, M), 0)
    col_ids = jax.lax.broadcasted_iota(jnp.int32, (2 * BATCH, M), 1)
    onehot = jnp.zeros((2 * BATCH, M), jnp.float32)
    for b in range(BATCH):
        onehot = onehot + jnp.where(
            (row_ids == b) & (col_ids == b * SEQ + e1p_ref[b]), 1.0, 0.0)
        onehot = onehot + jnp.where(
            (row_ids == BATCH + b) & (col_ids == b * SEQ + e2p_ref[b]), 1.0, 0.0)
    sel = jnp.dot(onehot.astype(MXU_DTYPE), x2_bf,
                  preferred_element_type=jnp.float32)            # (2B, H): [e1 rows; e2 rows]

    # classifier: concat([e1, e2]) @ Wc + bc, one MXU push, one lane-dense store
    combined = jnp.concatenate([sel[0:BATCH], sel[BATCH:2 * BATCH]],
                               axis=-1).astype(MXU_DTYPE)        # (B, 2H)
    wc_row = NUM_LAYERS * W_ROWS_PER_LAYER
    wc = w_ref[wc_row:wc_row + 2 * H, :]                         # (2H, CLASS_PAD)
    bc = b_ref[gb + 2:gb + 3, :]                                 # (1, CLASS_PAD)
    logits = jnp.dot(combined, wc, preferred_element_type=jnp.float32) + bc
    out_ref[...] = logits                                        # (B, 128) full store


# ------------------------------ Pallas wrapper --------------------------------
def fused_forward(e1_pos, e2_pos, x_emb2d, attn_bias, w_slab, b_slab):
    M = BATCH * SEQ
    out = pl.pallas_call(
        _fused_forward_kernel,
        out_shape=jax.ShapeDtypeStruct((BATCH, CLASS_PAD), jnp.float32),
        grid_spec=pltpu.PrefetchScalarGridSpec(
            num_scalar_prefetch=2,
            grid=(1,),
            in_specs=[
                pl.BlockSpec((M, HIDDEN), lambda i, *_: (0, 0)),        # activations
                pl.BlockSpec((M, M), lambda i, *_: (0, 0)),             # attention bias
                pl.BlockSpec((W_SLAB_ROWS, LANE), lambda i, *_: (0, 0)),  # bf16 weight slab
                pl.BlockSpec((B_SLAB_ROWS, LANE), lambda i, *_: (0, 0)),  # f32 bias/LN slab
            ],
            out_specs=pl.BlockSpec((BATCH, CLASS_PAD), lambda i, *_: (0, 0)),
            scratch_shapes=[]),
        compiler_params=pltpu.CompilerParams(dimension_semantics=("arbitrary",)),
    )(e1_pos, e2_pos, x_emb2d, attn_bias, w_slab, b_slab)
    return out[:, :NUM_CLASSES]


# ------------------------------ parameters & forward ---------------------------
def init_params(key):
    keys = jax.random.split(key, 64)
    kit = iter(keys)

    def nrm(shape, scale=0.02):
        return (scale * jax.random.normal(next(kit), shape)).astype(jnp.float32)

    L, H, I = NUM_LAYERS, HIDDEN, INTERMEDIATE

    w_slab = jnp.zeros((W_SLAB_ROWS, LANE), jnp.float32)
    b_slab = jnp.zeros((B_SLAB_ROWS, LANE), jnp.float32)
    ones_h = jnp.ones((H,), jnp.float32)

    for l in range(L):
        wr = l * W_ROWS_PER_LAYER
        br = l * BIAS_ROWS_PER_LAYER
        wqkv = jnp.concatenate([nrm((H, H)), nrm((H, H)), nrm((H, H))], axis=1)  # (H, 3H)
        bqkv = jnp.concatenate([nrm((1, H)), nrm((1, H)), nrm((1, H))], axis=1)  # (1, 3H)
        wo, bo = nrm((H, H)), nrm((1, H))
        w1, b1 = nrm((H, I)), nrm((1, I))
        w2, b2 = nrm((I, H)), nrm((1, H))

        w_slab = w_slab.at[wr:wr + H, :3 * H].set(wqkv)
        w_slab = w_slab.at[wr + H:wr + 2 * H, :H].set(wo)
        w_slab = w_slab.at[wr + 2 * H:wr + 3 * H, :I].set(w1)
        w_slab = w_slab.at[wr + 3 * H:wr + 3 * H + I, :H].set(w2)

        b_slab = b_slab.at[br + 0, :3 * H].set(bqkv[0])
        b_slab = b_slab.at[br + 1, :H].set(bo[0])
        b_slab = b_slab.at[br + 2, :H].set(ones_h)       # ln1 gamma
        b_slab = b_slab.at[br + 4, :I].set(b1[0])
        b_slab = b_slab.at[br + 5, :H].set(b2[0])
        b_slab = b_slab.at[br + 6, :H].set(ones_h)       # ln2 gamma
        # ln1/ln2 beta rows stay zero

    gb = L * BIAS_ROWS_PER_LAYER
    b_slab = b_slab.at[gb + 0, :H].set(ones_h)           # embedding LN gamma
    # embedding LN beta row stays zero

    wc = nrm((2 * H, NUM_CLASSES))                       # classifier, padded to 128 lanes
    w_slab = w_slab.at[L * W_ROWS_PER_LAYER:L * W_ROWS_PER_LAYER + 2 * H,
                       :NUM_CLASSES].set(wc)
    bc = nrm((1, NUM_CLASSES))
    b_slab = b_slab.at[gb + 2, :NUM_CLASSES].set(bc[0])

    return {
        "word_emb": nrm((VOCAB, H)),
        "pos_emb": nrm((SEQ, H)),
        "type_emb": nrm((2, H)),
        "w_slab": w_slab.astype(MXU_DTYPE),
        "b_slab": b_slab,
    }


def forward(params, input_ids, attention_mask):
    """Mirrors BertForREWithEntityStart.forward with labels=None."""
    B, S = input_ids.shape
    M = B * S
    # embeddings (gather is glue; everything else is one fused Pallas kernel)
    x = (jnp.take(params["word_emb"], input_ids, axis=0)
         + params["pos_emb"][None, :, :]
         + params["type_emb"][0][None, None, :])
    x2d = x.reshape(M, HIDDEN)                                  # batch folded into M

    # block-diagonal additive attention bias for the batch-folded (M, M) scores:
    # within-sequence padding keys -> -10000 (BERT-style), cross-sequence -> -1e9
    seg = jnp.repeat(jnp.arange(B, dtype=jnp.int32), S)         # (M,)
    same_seq = seg[:, None] == seg[None, :]
    pad_bias = (attention_mask.astype(jnp.float32).reshape(1, M) - 1.0) * 10000.0
    attn_bias = jnp.where(same_seq, pad_bias, -1.0e9).astype(jnp.float32)

    # (input_ids == e_token_id).float().argmax(dim=1)  -> first occurrence
    e1_pos = jnp.argmax((input_ids == E1_TOKEN_ID).astype(jnp.float32), axis=1).astype(jnp.int32)
    e2_pos = jnp.argmax((input_ids == E2_TOKEN_ID).astype(jnp.float32), axis=1).astype(jnp.int32)

    logits = fused_forward(e1_pos, e2_pos, x2d, attn_bias,
                           params["w_slab"], params["b_slab"])
    return {"loss": None, "logits": logits}


# ------------------------------------ main -------------------------------------
if __name__ == "__main__":
    key = jax.random.PRNGKey(0)
    pkey, dkey = jax.random.split(key)
    params = init_params(pkey)

    input_ids = jax.random.randint(dkey, (BATCH, SEQ), 0, VOCAB_BASE, dtype=jnp.int32)
    # place entity-start markers deterministically
    input_ids = input_ids.at[0, 3].set(E1_TOKEN_ID).at[0, 7].set(E2_TOKEN_ID)
    input_ids = input_ids.at[1, 5].set(E1_TOKEN_ID).at[1, 10].set(E2_TOKEN_ID)
    attention_mask = jnp.ones((BATCH, SEQ), jnp.int32).at[1, 13:].set(0)

    out = forward(params, input_ids, attention_mask)
    logits = jax.block_until_ready(out["logits"])
    assert logits.shape == (BATCH, NUM_CLASSES) and logits.dtype == jnp.float32
    print("KERNEL_OK")
</pallas_src>

<mosaic_0001>
module attributes {stable_mosaic.version = 11 : i64} {
  func.func @_fused_forward_kernel(%arg0: i32, %arg1: memref<2xi32, #tpu.memory_space<smem>>, %arg2: memref<2xi32, #tpu.memory_space<smem>>, %arg3: memref<32x32xf32, #tpu.memory_space<vmem>>, %arg4: memref<32x32xf32, #tpu.memory_space<vmem>>, %arg5: memref<384x128xbf16, #tpu.memory_space<vmem>>, %arg6: memref<24x128xf32, #tpu.memory_space<vmem>>, %arg7: memref<2x128xf32, #tpu.memory_space<vmem>>) attributes {dimension_semantics = [#tpu.dimension_semantics<arbitrary>], iteration_bounds = array<i64: 1>, scalar_prefetch = 2 : i64, scratch_operands = 0 : i64, tpu.core_type = #tpu.core_type<tc>, window_params = [{pipeline_mode = #tpu.pipeline_mode<synchronous>, transform_indices = @transform_0, window_bounds = array<i64: 32, 32>}, {pipeline_mode = #tpu.pipeline_mode<synchronous>, transform_indices = @transform_1, window_bounds = array<i64: 32, 32>}, {pipeline_mode = #tpu.pipeline_mode<synchronous>, transform_indices = @transform_2, window_bounds = array<i64: 384, 128>}, {pipeline_mode = #tpu.pipeline_mode<synchronous>, transform_indices = @transform_3, window_bounds = array<i64: 24, 128>}, {pipeline_mode = #tpu.pipeline_mode<synchronous>, transform_indices = @transform_4, window_bounds = array<i64: 2, 128>}]} {
    %c0 = arith.constant 0 : index
    %c0_0 = arith.constant 0 : index
    %0 = vector.load %arg4[%c0, %c0_0] : memref<32x32xf32, #tpu.memory_space<vmem>>, vector<32x32xf32>
    %c16 = arith.constant 16 : index
    %c0_1 = arith.constant 0 : index
    %1 = vector.load %arg6[%c16, %c0_1] : memref<24x128xf32, #tpu.memory_space<vmem>>, vector<1x32xf32>
    %c17 = arith.constant 17 : index
    %c0_2 = arith.constant 0 : index
    %2 = vector.load %arg6[%c17, %c0_2] : memref<24x128xf32, #tpu.memory_space<vmem>>, vector<1x32xf32>
    %c0_3 = arith.constant 0 : index
    %c0_4 = arith.constant 0 : index
    %3 = vector.load %arg3[%c0_3, %c0_4] : memref<32x32xf32, #tpu.memory_space<vmem>>, vector<32x32xf32>
    %cst = arith.constant dense<0.000000e+00> : vector<32xf32>
    %4 = vector.multi_reduction <add>, %3, %cst [1] : vector<32x32xf32> to vector<32xf32>
    %5 = vector.shape_cast %4 : vector<32xf32> to vector<32x1xf32>
    %cst_5 = arith.constant 3.200000e+01 : f32
    %6 = vector.broadcast %cst_5 : f32 to vector<32x1xf32>
    %7 = arith.divf %5, %6 : vector<32x1xf32>
    %8 = vector.broadcast %7 : vector<32x1xf32> to vector<32x32xf32>
    %9 = arith.subf %3, %8 : vector<32x32xf32>
    %10 = arith.mulf %9, %9 : vector<32x32xf32>
    %cst_6 = arith.constant dense<0.000000e+00> : vector<32xf32>
    %11 = vector.multi_reduction <add>, %10, %cst_6 [1] : vector<32x32xf32> to vector<32xf32>
    %12 = vector.shape_cast %11 : vector<32xf32> to vector<32x1xf32>
    %cst_7 = arith.constant 3.200000e+01 : f32
    %13 = vector.broadcast %cst_7 : f32 to vector<32x1xf32>
    %14 = arith.divf %12, %13 : vector<32x1xf32>
    %15 = vector.broadcast %7 : vector<32x1xf32> to vector<32x32xf32>
    %16 = arith.subf %3, %15 : vector<32x32xf32>
    %cst_8 = arith.constant 9.99999996E-13 : f32
    %17 = vector.broadcast %cst_8 : f32 to vector<32x1xf32>
    %18 = arith.addf %14, %17 : vector<32x1xf32>
    %19 = math.rsqrt %18 : vector<32x1xf32>
    %20 = vector.broadcast %19 : vector<32x1xf32> to vector<32x32xf32>
    %21 = arith.mulf %16, %20 : vector<32x32xf32>
    %22 = vector.broadcast %1 : vector<1x32xf32> to vector<32x32xf32>
    %23 = arith.mulf %21, %22 : vector<32x32xf32>
    %24 = vector.broadcast %2 : vector<1x32xf32> to vector<32x32xf32>
    %25 = arith.addf %23, %24 : vector<32x32xf32>
    %26 = arith.truncf %25 : vector<32x32xf32> to vector<32x32xbf16>
    %c0_9 = arith.constant 0 : index
    %c0_10 = arith.constant 0 : index
    %27 = vector.load %arg5[%c0_9, %c0_10] : memref<384x128xbf16, #tpu.memory_space<vmem>>, vector<32x96xbf16>
    %c0_11 = arith.constant 0 : index
    %c0_12 = arith.constant 0 : index
    %28 = vector.load %arg6[%c0_11, %c0_12] : memref<24x128xf32, #tpu.memory_space<vmem>>, vector<1x96xf32>
    %cst_13 = arith.constant dense<0.000000e+00> : vector<32x96xf32>
    %29 = tpu.matmul %26, %27, %cst_13 {dimension_numbers = #tpu.dot_dimension_numbers<[1], [0], [0], [1], [0, 0, 1, 1], [], []>} : vector<32x32xbf16>, vector<32x96xbf16>, vector<32x96xf32> -> vector<32x96xf32>
    %30 = vector.broadcast %28 : vector<1x96xf32> to vector<32x96xf32>
    %31 = arith.addf %29, %30 : vector<32x96xf32>
    %32 = arith.truncf %31 : vector<32x96xf32> to vector<32x96xbf16>
    %33 = vector.extract_strided_slice %32 {offsets = [0, 0], sizes = [32, 16], strides = [1, 1]} : vector<32x96xbf16> to vector<32x16xbf16>
    %34 = vector.extract_strided_slice %32 {offsets = [0, 32], sizes = [32, 16], strides = [1, 1]} : vector<32x96xbf16> to vector<32x16xbf16>
    %35 = vector.extract_strided_slice %32 {offsets = [0, 64], sizes = [32, 16], strides = [1, 1]} : vector<32x96xbf16> to vector<32x16xbf16>
    %cst_14 = arith.constant dense<0.000000e+00> : vector<32x32xf32>
    %36 = tpu.matmul %33, %34, %cst_14 {dimension_numbers = #tpu.dot_dimension_numbers<[1], [1], [0], [0], [0, 0, 1, 0], [], []>} : vector<32x16xbf16>, vector<32x16xbf16>, vector<32x32xf32> -> vector<32x32xf32>
    %cst_15 = arith.constant 2.500000e-01 : f32
    %37 = vector.broadcast %cst_15 : f32 to vector<32x32xf32>
    %38 = arith.mulf %36, %37 : vector<32x32xf32>
    %39 = arith.addf %38, %0 : vector<32x32xf32>
    %cst_16 = arith.constant dense<0xFF800000> : vector<32xf32>
    %40 = vector.multi_reduction <maximumf>, %39, %cst_16 [1] : vector<32x32xf32> to vector<32xf32>
    %41 = vector.shape_cast %40 : vector<32xf32> to vector<32x1xf32>
    %42 = vector.broadcast %41 : vector<32x1xf32> to vector<32x32xf32>
    %43 = arith.subf %39, %42 : vector<32x32xf32>
    %44 = math.exp %43 : vector<32x32xf32>
    %cst_17 = arith.constant dense<0.000000e+00> : vector<32xf32>
    %45 = vector.multi_reduction <add>, %44, %cst_17 [1] : vector<32x32xf32> to vector<32xf32>
    %46 = vector.shape_cast %45 : vector<32xf32> to vector<32x1xf32>
    %47 = tpu.reciprocal %46 {approx = true} : vector<32x1xf32> -> vector<32x1xf32>
    %48 = vector.broadcast %47 : vector<32x1xf32> to vector<32x32xf32>
    %49 = arith.mulf %44, %48 : vector<32x32xf32>
    %50 = arith.truncf %49 : vector<32x32xf32> to vector<32x32xbf16>
    %cst_18 = arith.constant dense<0.000000e+00> : vector<32x16xf32>
    %51 = tpu.matmul %50, %35, %cst_18 {dimension_numbers = #tpu.dot_dimension_numbers<[1], [0], [0], [1], [0, 0, 1, 1], [], []>} : vector<32x32xbf16>, vector<32x16xbf16>, vector<32x16xf32> -> vector<32x16xf32>
    %52 = vector.extract_strided_slice %32 {offsets = [0, 16], sizes = [32, 16], strides = [1, 1]} : vector<32x96xbf16> to vector<32x16xbf16>
    %53 = vector.extract_strided_slice %32 {offsets = [0, 48], sizes = [32, 16], strides = [1, 1]} : vector<32x96xbf16> to vector<32x16xbf16>
    %54 = vector.extract_strided_slice %32 {offsets = [0, 80], sizes = [32, 16], strides = [1, 1]} : vector<32x96xbf16> to vector<32x16xbf16>
    %cst_19 = arith.constant dense<0.000000e+00> : vector<32x32xf32>
    %55 = tpu.matmul %52, %53, %cst_19 {dimension_numbers = #tpu.dot_dimension_numbers<[1], [1], [0], [0], [0, 0, 1, 0], [], []>} : vector<32x16xbf16>, vector<32x16xbf16>, vector<32x32xf32> -> vector<32x32xf32>
    %cst_20 = arith.constant 2.500000e-01 : f32
    %56 = vector.broadcast %cst_20 : f32 to vector<32x32xf32>
    %57 = arith.mulf %55, %56 : vector<32x32xf32>
    %58 = arith.addf %57, %0 : vector<32x32xf32>
    %cst_21 = arith.constant dense<0xFF800000> : vector<32xf32>
    %59 = vector.multi_reduction <maximumf>, %58, %cst_21 [1] : vector<32x32xf32> to vector<32xf32>
    %60 = vector.shape_cast %59 : vector<32xf32> to vector<32x1xf32>
    %61 = vector.broadcast %60 : vector<32x1xf32> to vector<32x32xf32>
    %62 = arith.subf %58, %61 : vector<32x32xf32>
    %63 = math.exp %62 : vector<32x32xf32>
    %cst_22 = arith.constant dense<0.000000e+00> : vector<32xf32>
    %64 = vector.multi_reduction <add>, %63, %cst_22 [1] : vector<32x32xf32> to vector<32xf32>
    %65 = vector.shape_cast %64 : vector<32xf32> to vector<32x1xf32>
    %66 = tpu.reciprocal %65 {approx = true} : vector<32x1xf32> -> vector<32x1xf32>
    %67 = vector.broadcast %66 : vector<32x1xf32> to vector<32x32xf32>
    %68 = arith.mulf %63, %67 : vector<32x32xf32>
    %69 = arith.truncf %68 : vector<32x32xf32> to vector<32x32xbf16>
    %cst_23 = arith.constant dense<0.000000e+00> : vector<32x16xf32>
    %70 = tpu.matmul %69, %54, %cst_23 {dimension_numbers = #tpu.dot_dimension_numbers<[1], [0], [0], [1], [0, 0, 1, 1], [], []>} : vector<32x32xbf16>, vector<32x16xbf16>, vector<32x16xf32> -> vector<32x16xf32>
    %71 = tpu.concatenate %51, %70 in 1 : vector<32x16xf32>, vector<32x16xf32> -> vector<32x32xf32>
    %72 = arith.truncf %71 : vector<32x32xf32> to vector<32x32xbf16>
    %c32 = arith.constant 32 : index
    %c0_24 = arith.constant 0 : index
    %73 = vector.load %arg5[%c32, %c0_24] : memref<384x128xbf16, #tpu.memory_space<vmem>>, vector<32x32xbf16>
    %c1 = arith.constant 1 : index
    %c0_25 = arith.constant 0 : index
    %74 = vector.load %arg6[%c1, %c0_25] : memref<24x128xf32, #tpu.memory_space<vmem>>, vector<1x32xf32>
    %cst_26 = arith.constant dense<0.000000e+00> : vector<32x32xf32>
    %75 = tpu.matmul %72, %73, %cst_26 {dimension_numbers = #tpu.dot_dimension_numbers<[1], [0], [0], [1], [0, 0, 1, 1], [], []>} : vector<32x32xbf16>, vector<32x32xbf16>, vector<32x32xf32> -> vector<32x32xf32>
    %76 = vector.broadcast %74 : vector<1x32xf32> to vector<32x32xf32>
    %77 = arith.addf %75, %76 : vector<32x32xf32>
    %c2 = arith.constant 2 : index
    %c0_27 = arith.constant 0 : index
    %78 = vector.load %arg6[%c2, %c0_27] : memref<24x128xf32, #tpu.memory_space<vmem>>, vector<1x32xf32>
    %c3 = arith.constant 3 : index
    %c0_28 = arith.constant 0 : index
    %79 = vector.load %arg6[%c3, %c0_28] : memref<24x128xf32, #tpu.memory_space<vmem>>, vector<1x32xf32>
    %80 = arith.addf %25, %77 : vector<32x32xf32>
    %cst_29 = arith.constant dense<0.000000e+00> : vector<32xf32>
    %81 = vector.multi_reduction <add>, %80, %cst_29 [1] : vector<32x32xf32> to vector<32xf32>
    %82 = vector.shape_cast %81 : vector<32xf32> to vector<32x1xf32>
    %cst_30 = arith.constant 3.200000e+01 : f32
    %83 = vector.broadcast %cst_30 : f32 to vector<32x1xf32>
    %84 = arith.divf %82, %83 : vector<32x1xf32>
    %85 = vector.broadcast %84 : vector<32x1xf32> to vector<32x32xf32>
    %86 = arith.subf %80, %85 : vector<32x32xf32>
    %87 = arith.mulf %86, %86 : vector<32x32xf32>
    %cst_31 = arith.constant dense<0.000000e+00> : vector<32xf32>
    %88 = vector.multi_reduction <add>, %87, %cst_31 [1] : vector<32x32xf32> to vector<32xf32>
    %89 = vector.shape_cast %88 : vector<32xf32> to vector<32x1xf32>
    %cst_32 = arith.constant 3.200000e+01 : f32
    %90 = vector.broadcast %cst_32 : f32 to vector<32x1xf32>
    %91 = arith.divf %89, %90 : vector<32x1xf32>
    %92 = vector.broadcast %84 : vector<32x1xf32> to vector<32x32xf32>
    %93 = arith.subf %80, %92 : vector<32x32xf32>
    %cst_33 = arith.constant 9.99999996E-13 : f32
    %94 = vector.broadcast %cst_33 : f32 to vector<32x1xf32>
    %95 = arith.addf %91, %94 : vector<32x1xf32>
    %96 = math.rsqrt %95 : vector<32x1xf32>
    %97 = vector.broadcast %96 : vector<32x1xf32> to vector<32x32xf32>
    %98 = arith.mulf %93, %97 : vector<32x32xf32>
    %99 = vector.broadcast %78 : vector<1x32xf32> to vector<32x32xf32>
    %100 = arith.mulf %98, %99 : vector<32x32xf32>
    %101 = vector.broadcast %79 : vector<1x32xf32> to vector<32x32xf32>
    %102 = arith.addf %100, %101 : vector<32x32xf32>
    %103 = arith.truncf %102 : vector<32x32xf32> to vector<32x32xbf16>
    %c64 = arith.constant 64 : index
    %c0_34 = arith.constant 0 : index
    %104 = vector.load %arg5[%c64, %c0_34] : memref<384x128xbf16, #tpu.memory_space<vmem>>, vector<32x64xbf16>
    %c4 = arith.constant 4 : index
    %c0_35 = arith.constant 0 : index
    %105 = vector.load %arg6[%c4, %c0_35] : memref<24x128xf32, #tpu.memory_space<vmem>>, vector<1x64xf32>
    %cst_36 = arith.constant dense<0.000000e+00> : vector<32x64xf32>
    %106 = tpu.matmul %103, %104, %cst_36 {dimension_numbers = #tpu.dot_dimension_numbers<[1], [0], [0], [1], [0, 0, 1, 1], [], []>} : vector<32x32xbf16>, vector<32x64xbf16>, vector<32x64xf32> -> vector<32x64xf32>
    %107 = vector.broadcast %105 : vector<1x64xf32> to vector<32x64xf32>
    %108 = arith.addf %106, %107 : vector<32x64xf32>
    %109 = arith.mulf %108, %108 : vector<32x64xf32>
    %110 = arith.mulf %108, %109 : vector<32x64xf32>
    %cst_37 = arith.constant 4.471500e-02 : f32
    %111 = vector.broadcast %cst_37 : f32 to vector<32x64xf32>
    %112 = arith.mulf %111, %110 : vector<32x64xf32>
    %113 = arith.addf %108, %112 : vector<32x64xf32>
    %cst_38 = arith.constant 0.797884583 : f32
    %114 = vector.broadcast %cst_38 : f32 to vector<32x64xf32>
    %115 = arith.mulf %114, %113 : vector<32x64xf32>
    %116 = math.tanh %115 : vector<32x64xf32>
    %cst_39 = arith.constant 1.000000e+00 : f32
    %117 = vector.broadcast %cst_39 : f32 to vector<32x64xf32>
    %118 = arith.addf %117, %116 : vector<32x64xf32>
    %cst_40 = arith.constant 5.000000e-01 : f32
    %119 = vector.broadcast %cst_40 : f32 to vector<32x64xf32>
    %120 = arith.mulf %119, %118 : vector<32x64xf32>
    %121 = arith.mulf %108, %120 : vector<32x64xf32>
    %c96 = arith.constant 96 : index
    %c0_41 = arith.constant 0 : index
    %122 = vector.load %arg5[%c96, %c0_41] : memref<384x128xbf16, #tpu.memory_space<vmem>>, vector<64x32xbf16>
    %c5 = arith.constant 5 : index
    %c0_42 = arith.constant 0 : index
    %123 = vector.load %arg6[%c5, %c0_42] : memref<24x128xf32, #tpu.memory_space<vmem>>, vector<1x32xf32>
    %124 = arith.truncf %121 : vector<32x64xf32> to vector<32x64xbf16>
    %cst_43 = arith.constant dense<0.000000e+00> : vector<32x32xf32>
    %125 = tpu.matmul %124, %122, %cst_43 {dimension_numbers = #tpu.dot_dimension_numbers<[1], [0], [0], [1], [0, 0, 1, 1], [], []>} : vector<32x64xbf16>, vector<64x32xbf16>, vector<32x32xf32> -> vector<32x32xf32>
    %126 = vector.broadcast %123 : vector<1x32xf32> to vector<32x32xf32>
    %127 = arith.addf %125, %126 : vector<32x32xf32>
    %c6 = arith.constant 6 : index
    %c0_44 = arith.constant 0 : index
    %128 = vector.load %arg6[%c6, %c0_44] : memref<24x128xf32, #tpu.memory_space<vmem>>, vector<1x32xf32>
    %c7 = arith.constant 7 : index
    %c0_45 = arith.constant 0 : index
    %129 = vector.load %arg6[%c7, %c0_45] : memref<24x128xf32, #tpu.memory_space<vmem>>, vector<1x32xf32>
    %130 = arith.addf %102, %127 : vector<32x32xf32>
    %cst_46 = arith.constant dense<0.000000e+00> : vector<32xf32>
    %131 = vector.multi_reduction <add>, %130, %cst_46 [1] : vector<32x32xf32> to vector<32xf32>
    %132 = vector.shape_cast %131 : vector<32xf32> to vector<32x1xf32>
    %cst_47 = arith.constant 3.200000e+01 : f32
    %133 = vector.broadcast %cst_47 : f32 to vector<32x1xf32>
    %134 = arith.divf %132, %133 : vector<32x1xf32>
    %135 = vector.broadcast %134 : vector<32x1xf32> to vector<32x32xf32>
    %136 = arith.subf %130, %135 : vector<32x32xf32>
    %137 = arith.mulf %136, %136 : vector<32x32xf32>
    %cst_48 = arith.constant dense<0.000000e+00> : vector<32xf32>
    %138 = vector.multi_reduction <add>, %137, %cst_48 [1] : vector<32x32xf32> to vector<32xf32>
    %139 = vector.shape_cast %138 : vector<32xf32> to vector<32x1xf32>
    %cst_49 = arith.constant 3.200000e+01 : f32
    %140 = vector.broadcast %cst_49 : f32 to vector<32x1xf32>
    %141 = arith.divf %139, %140 : vector<32x1xf32>
    %142 = vector.broadcast %134 : vector<32x1xf32> to vector<32x32xf32>
    %143 = arith.subf %130, %142 : vector<32x32xf32>
    %cst_50 = arith.constant 9.99999996E-13 : f32
    %144 = vector.broadcast %cst_50 : f32 to vector<32x1xf32>
    %145 = arith.addf %141, %144 : vector<32x1xf32>
    %146 = math.rsqrt %145 : vector<32x1xf32>
    %147 = vector.broadcast %146 : vector<32x1xf32> to vector<32x32xf32>
    %148 = arith.mulf %143, %147 : vector<32x32xf32>
    %149 = vector.broadcast %128 : vector<1x32xf32> to vector<32x32xf32>
    %150 = arith.mulf %148, %149 : vector<32x32xf32>
    %151 = vector.broadcast %129 : vector<1x32xf32> to vector<32x32xf32>
    %152 = arith.addf %150, %151 : vector<32x32xf32>
    %153 = arith.truncf %152 : vector<32x32xf32> to vector<32x32xbf16>
    %c160 = arith.constant 160 : index
    %c0_51 = arith.constant 0 : index
    %154 = vector.load %arg5[%c160, %c0_51] : memref<384x128xbf16, #tpu.memory_space<vmem>>, vector<32x96xbf16>
    %c8 = arith.constant 8 : index
    %c0_52 = arith.constant 0 : index
    %155 = vector.load %arg6[%c8, %c0_52] : memref<24x128xf32, #tpu.memory_space<vmem>>, vector<1x96xf32>
    %cst_53 = arith.constant dense<0.000000e+00> : vector<32x96xf32>
    %156 = tpu.matmul %153, %154, %cst_53 {dimension_numbers = #tpu.dot_dimension_numbers<[1], [0], [0], [1], [0, 0, 1, 1], [], []>} : vector<32x32xbf16>, vector<32x96xbf16>, vector<32x96xf32> -> vector<32x96xf32>
    %157 = vector.broadcast %155 : vector<1x96xf32> to vector<32x96xf32>
    %158 = arith.addf %156, %157 : vector<32x96xf32>
    %159 = arith.truncf %158 : vector<32x96xf32> to vector<32x96xbf16>
    %160 = vector.extract_strided_slice %159 {offsets = [0, 0], sizes = [32, 16], strides = [1, 1]} : vector<32x96xbf16> to vector<32x16xbf16>
    %161 = vector.extract_strided_slice %159 {offsets = [0, 32], sizes = [32, 16], strides = [1, 1]} : vector<32x96xbf16> to vector<32x16xbf16>
    %162 = vector.extract_strided_slice %159 {offsets = [0, 64], sizes = [32, 16], strides = [1, 1]} : vector<32x96xbf16> to vector<32x16xbf16>
    %cst_54 = arith.constant dense<0.000000e+00> : vector<32x32xf32>
    %163 = tpu.matmul %160, %161, %cst_54 {dimension_numbers = #tpu.dot_dimension_numbers<[1], [1], [0], [0], [0, 0, 1, 0], [], []>} : vector<32x16xbf16>, vector<32x16xbf16>, vector<32x32xf32> -> vector<32x32xf32>
    %cst_55 = arith.constant 2.500000e-01 : f32
    %164 = vector.broadcast %cst_55 : f32 to vector<32x32xf32>
    %165 = arith.mulf %163, %164 : vector<32x32xf32>
    %166 = arith.addf %165, %0 : vector<32x32xf32>
    %cst_56 = arith.constant dense<0xFF800000> : vector<32xf32>
    %167 = vector.multi_reduction <maximumf>, %166, %cst_56 [1] : vector<32x32xf32> to vector<32xf32>
    %168 = vector.shape_cast %167 : vector<32xf32> to vector<32x1xf32>
    %169 = vector.broadcast %168 : vector<32x1xf32> to vector<32x32xf32>
    %170 = arith.subf %166, %169 : vector<32x32xf32>
    %171 = math.exp %170 : vector<32x32xf32>
    %cst_57 = arith.constant dense<0.000000e+00> : vector<32xf32>
    %172 = vector.multi_reduction <add>, %171, %cst_57 [1] : vector<32x32xf32> to vector<32xf32>
    %173 = vector.shape_cast %172 : vector<32xf32> to vector<32x1xf32>
    %174 = tpu.reciprocal %173 {approx = true} : vector<32x1xf32> -> vector<32x1xf32>
    %175 = vector.broadcast %174 : vector<32x1xf32> to vector<32x32xf32>
    %176 = arith.mulf %171, %175 : vector<32x32xf32>
    %177 = arith.truncf %176 : vector<32x32xf32> to vector<32x32xbf16>
    %cst_58 = arith.constant dense<0.000000e+00> : vector<32x16xf32>
    %178 = tpu.matmul %177, %162, %cst_58 {dimension_numbers = #tpu.dot_dimension_numbers<[1], [0], [0], [1], [0, 0, 1, 1], [], []>} : vector<32x32xbf16>, vector<32x16xbf16>, vector<32x16xf32> -> vector<32x16xf32>
    %179 = vector.extract_strided_slice %159 {offsets = [0, 16], sizes = [32, 16], strides = [1, 1]} : vector<32x96xbf16> to vector<32x16xbf16>
    %180 = vector.extract_strided_slice %159 {offsets = [0, 48], sizes = [32, 16], strides = [1, 1]} : vector<32x96xbf16> to vector<32x16xbf16>
    %181 = vector.extract_strided_slice %159 {offsets = [0, 80], sizes = [32, 16], strides = [1, 1]} : vector<32x96xbf16> to vector<32x16xbf16>
    %cst_59 = arith.constant dense<0.000000e+00> : vector<32x32xf32>
    %182 = tpu.matmul %179, %180, %cst_59 {dimension_numbers = #tpu.dot_dimension_numbers<[1], [1], [0], [0], [0, 0, 1, 0], [], []>} : vector<32x16xbf16>, vector<32x16xbf16>, vector<32x32xf32> -> vector<32x32xf32>
    %cst_60 = arith.constant 2.500000e-01 : f32
    %183 = vector.broadcast %cst_60 : f32 to vector<32x32xf32>
    %184 = arith.mulf %182, %183 : vector<32x32xf32>
    %185 = arith.addf %184, %0 : vector<32x32xf32>
    %cst_61 = arith.constant dense<0xFF800000> : vector<32xf32>
    %186 = vector.multi_reduction <maximumf>, %185, %cst_61 [1] : vector<32x32xf32> to vector<32xf32>
    %187 = vector.shape_cast %186 : vector<32xf32> to vector<32x1xf32>
    %188 = vector.broadcast %187 : vector<32x1xf32> to vector<32x32xf32>
    %189 = arith.subf %185, %188 : vector<32x32xf32>
    %190 = math.exp %189 : vector<32x32xf32>
    %cst_62 = arith.constant dense<0.000000e+00> : vector<32xf32>
    %191 = vector.multi_reduction <add>, %190, %cst_62 [1] : vector<32x32xf32> to vector<32xf32>
    %192 = vector.shape_cast %191 : vector<32xf32> to vector<32x1xf32>
    %193 = tpu.reciprocal %192 {approx = true} : vector<32x1xf32> -> vector<32x1xf32>
    %194 = vector.broadcast %193 : vector<32x1xf32> to vector<32x32xf32>
    %195 = arith.mulf %190, %194 : vector<32x32xf32>
    %196 = arith.truncf %195 : vector<32x32xf32> to vector<32x32xbf16>
    %cst_63 = arith.constant dense<0.000000e+00> : vector<32x16xf32>
    %197 = tpu.matmul %196, %181, %cst_63 {dimension_numbers = #tpu.dot_dimension_numbers<[1], [0], [0], [1], [0, 0, 1, 1], [], []>} : vector<32x32xbf16>, vector<32x16xbf16>, vector<32x16xf32> -> vector<32x16xf32>
    %198 = tpu.concatenate %178, %197 in 1 : vector<32x16xf32>, vector<32x16xf32> -> vector<32x32xf32>
    %199 = arith.truncf %198 : vector<32x32xf32> to vector<32x32xbf16>
    %c192 = arith.constant 192 : index
    %c0_64 = arith.constant 0 : index
    %200 = vector.load %arg5[%c192, %c0_64] : memref<384x128xbf16, #tpu.memory_space<vmem>>, vector<32x32xbf16>
    %c9 = arith.constant 9 : index
    %c0_65 = arith.constant 0 : index
    %201 = vector.load %arg6[%c9, %c0_65] : memref<24x128xf32, #tpu.memory_space<vmem>>, vector<1x32xf32>
    %cst_66 = arith.constant dense<0.000000e+00> : vector<32x32xf32>
    %202 = tpu.matmul %199, %200, %cst_66 {dimension_numbers = #tpu.dot_dimension_numbers<[1], [0], [0], [1], [0, 0, 1, 1], [], []>} : vector<32x32xbf16>, vector<32x32xbf16>, vector<32x32xf32> -> vector<32x32xf32>
    %203 = vector.broadcast %201 : vector<1x32xf32> to vector<32x32xf32>
    %204 = arith.addf %202, %203 : vector<32x32xf32>
    %c10 = arith.constant 10 : index
    %c0_67 = arith.constant 0 : index
    %205 = vector.load %arg6[%c10, %c0_67] : memref<24x128xf32, #tpu.memory_space<vmem>>, vector<1x32xf32>
    %c11 = arith.constant 11 : index
    %c0_68 = arith.constant 0 : index
    %206 = vector.load %arg6[%c11, %c0_68] : memref<24x128xf32, #tpu.memory_space<vmem>>, vector<1x32xf32>
    %207 = arith.addf %152, %204 : vector<32x32xf32>
    %cst_69 = arith.constant dense<0.000000e+00> : vector<32xf32>
    %208 = vector.multi_reduction <add>, %207, %cst_69 [1] : vector<32x32xf32> to vector<32xf32>
    %209 = vector.shape_cast %208 : vector<32xf32> to vector<32x1xf32>
    %cst_70 = arith.constant 3.200000e+01 : f32
    %210 = vector.broadcast %cst_70 : f32 to vector<32x1xf32>
    %211 = arith.divf %209, %210 : vector<32x1xf32>
    %212 = vector.broadcast %211 : vector<32x1xf32> to vector<32x32xf32>
    %213 = arith.subf %207, %212 : vector<32x32xf32>
    %214 = arith.mulf %213, %213 : vector<32x32xf32>
    %cst_71 = arith.constant dense<0.000000e+00> : vector<32xf32>
    %215 = vector.multi_reduction <add>, %214, %cst_71 [1] : vector<32x32xf32> to vector<32xf32>
    %216 = vector.shape_cast %215 : vector<32xf32> to vector<32x1xf32>
    %cst_72 = arith.constant 3.200000e+01 : f32
    %217 = vector.broadcast %cst_72 : f32 to vector<32x1xf32>
    %218 = arith.divf %216, %217 : vector<32x1xf32>
    %219 = vector.broadcast %211 : vector<32x1xf32> to vector<32x32xf32>
    %220 = arith.subf %207, %219 : vector<32x32xf32>
    %cst_73 = arith.constant 9.99999996E-13 : f32
    %221 = vector.broadcast %cst_73 : f32 to vector<32x1xf32>
    %222 = arith.addf %218, %221 : vector<32x1xf32>
    %223 = math.rsqrt %222 : vector<32x1xf32>
    %224 = vector.broadcast %223 : vector<32x1xf32> to vector<32x32xf32>
    %225 = arith.mulf %220, %224 : vector<32x32xf32>
    %226 = vector.broadcast %205 : vector<1x32xf32> to vector<32x32xf32>
    %227 = arith.mulf %225, %226 : vector<32x32xf32>
    %228 = vector.broadcast %206 : vector<1x32xf32> to vector<32x32xf32>
    %229 = arith.addf %227, %228 : vector<32x32xf32>
    %230 = arith.truncf %229 : vector<32x32xf32> to vector<32x32xbf16>
    %c224 = arith.constant 224 : index
    %c0_74 = arith.constant 0 : index
    %231 = vector.load %arg5[%c224, %c0_74] : memref<384x128xbf16, #tpu.memory_space<vmem>>, vector<32x64xbf16>
    %c12 = arith.constant 12 : index
    %c0_75 = arith.constant 0 : index
    %232 = vector.load %arg6[%c12, %c0_75] : memref<24x128xf32, #tpu.memory_space<vmem>>, vector<1x64xf32>
    %cst_76 = arith.constant dense<0.000000e+00> : vector<32x64xf32>
    %233 = tpu.matmul %230, %231, %cst_76 {dimension_numbers = #tpu.dot_dimension_numbers<[1], [0], [0], [1], [0, 0, 1, 1], [], []>} : vector<32x32xbf16>, vector<32x64xbf16>, vector<32x64xf32> -> vector<32x64xf32>
    %234 = vector.broadcast %232 : vector<1x64xf32> to vector<32x64xf32>
    %235 = arith.addf %233, %234 : vector<32x64xf32>
    %236 = arith.mulf %235, %235 : vector<32x64xf32>
    %237 = arith.mulf %235, %236 : vector<32x64xf32>
    %cst_77 = arith.constant 4.471500e-02 : f32
    %238 = vector.broadcast %cst_77 : f32 to vector<32x64xf32>
    %239 = arith.mulf %238, %237 : vector<32x64xf32>
    %240 = arith.addf %235, %239 : vector<32x64xf32>
    %cst_78 = arith.constant 0.797884583 : f32
    %241 = vector.broadcast %cst_78 : f32 to vector<32x64xf32>
    %242 = arith.mulf %241, %240 : vector<32x64xf32>
    %243 = math.tanh %242 : vector<32x64xf32>
    %cst_79 = arith.constant 1.000000e+00 : f32
    %244 = vector.broadcast %cst_79 : f32 to vector<32x64xf32>
    %245 = arith.addf %244, %243 : vector<32x64xf32>
    %cst_80 = arith.constant 5.000000e-01 : f32
    %246 = vector.broadcast %cst_80 : f32 to vector<32x64xf32>
    %247 = arith.mulf %246, %245 : vector<32x64xf32>
    %248 = arith.mulf %235, %247 : vector<32x64xf32>
    %c256 = arith.constant 256 : index
    %c0_81 = arith.constant 0 : index
    %249 = vector.load %arg5[%c256, %c0_81] : memref<384x128xbf16, #tpu.memory_space<vmem>>, vector<64x32xbf16>
    %c13 = arith.constant 13 : index
    %c0_82 = arith.constant 0 : index
    %250 = vector.load %arg6[%c13, %c0_82] : memref<24x128xf32, #tpu.memory_space<vmem>>, vector<1x32xf32>
    %251 = arith.truncf %248 : vector<32x64xf32> to vector<32x64xbf16>
    %cst_83 = arith.constant dense<0.000000e+00> : vector<32x32xf32>
    %252 = tpu.matmul %251, %249, %cst_83 {dimension_numbers = #tpu.dot_dimension_numbers<[1], [0], [0], [1], [0, 0, 1, 1], [], []>} : vector<32x64xbf16>, vector<64x32xbf16>, vector<32x32xf32> -> vector<32x32xf32>
    %253 = vector.broadcast %250 : vector<1x32xf32> to vector<32x32xf32>
    %254 = arith.addf %252, %253 : vector<32x32xf32>
    %c14 = arith.constant 14 : index
    %c0_84 = arith.constant 0 : index
    %255 = vector.load %arg6[%c14, %c0_84] : memref<24x128xf32, #tpu.memory_space<vmem>>, vector<1x32xf32>
    %c15 = arith.constant 15 : index
    %c0_85 = arith.constant 0 : index
    %256 = vector.load %arg6[%c15, %c0_85] : memref<24x128xf32, #tpu.memory_space<vmem>>, vector<1x32xf32>
    %257 = arith.addf %229, %254 : vector<32x32xf32>
    %cst_86 = arith.constant dense<0.000000e+00> : vector<32xf32>
    %258 = vector.multi_reduction <add>, %257, %cst_86 [1] : vector<32x32xf32> to vector<32xf32>
    %259 = vector.shape_cast %258 : vector<32xf32> to vector<32x1xf32>
    %cst_87 = arith.constant 3.200000e+01 : f32
    %260 = vector.broadcast %cst_87 : f32 to vector<32x1xf32>
    %261 = arith.divf %259, %260 : vector<32x1xf32>
    %262 = vector.broadcast %261 : vector<32x1xf32> to vector<32x32xf32>
    %263 = arith.subf %257, %262 : vector<32x32xf32>
    %264 = arith.mulf %263, %263 : vector<32x32xf32>
    %cst_88 = arith.constant dense<0.000000e+00> : vector<32xf32>
    %265 = vector.multi_reduction <add>, %264, %cst_88 [1] : vector<32x32xf32> to vector<32xf32>
    %266 = vector.shape_cast %265 : vector<32xf32> to vector<32x1xf32>
    %cst_89 = arith.constant 3.200000e+01 : f32
    %267 = vector.broadcast %cst_89 : f32 to vector<32x1xf32>
    %268 = arith.divf %266, %267 : vector<32x1xf32>
    %269 = vector.broadcast %261 : vector<32x1xf32> to vector<32x32xf32>
    %270 = arith.subf %257, %269 : vector<32x32xf32>
    %cst_90 = arith.constant 9.99999996E-13 : f32
    %271 = vector.broadcast %cst_90 : f32 to vector<32x1xf32>
    %272 = arith.addf %268, %271 : vector<32x1xf32>
    %273 = math.rsqrt %272 : vector<32x1xf32>
    %274 = vector.broadcast %273 : vector<32x1xf32> to vector<32x32xf32>
    %275 = arith.mulf %270, %274 : vector<32x32xf32>
    %276 = vector.broadcast %255 : vector<1x32xf32> to vector<32x32xf32>
    %277 = arith.mulf %275, %276 : vector<32x32xf32>
    %278 = vector.broadcast %256 : vector<1x32xf32> to vector<32x32xf32>
    %279 = arith.addf %277, %278 : vector<32x32xf32>
    %280 = arith.truncf %279 : vector<32x32xf32> to vector<32x32xbf16>
    %281 = tpu.iota {dimensions = array<i32: 0>} : vector<4x32xi32>
    %282 = tpu.iota {dimensions = array<i32: 1>} : vector<4x32xi32>
    %cst_91 = arith.constant 0.000000e+00 : f32
    %283 = vector.broadcast %cst_91 : f32 to vector<4x32xf32>
    %c0_i32 = arith.constant 0 : i32
    %284 = vector.broadcast %c0_i32 : i32 to vector<4x32xi32>
    %285 = arith.cmpi eq, %281, %284 : vector<4x32xi32>
    %c0_92 = arith.constant 0 : index
    %286 = memref.load %arg1[%c0_92] : memref<2xi32, #tpu.memory_space<smem>>
    %c0_i32_93 = arith.constant 0 : i32
    %287 = arith.addi %c0_i32_93, %286 : i32
    %288 = vector.broadcast %287 : i32 to vector<4x32xi32>
    %289 = arith.cmpi eq, %282, %288 : vector<4x32xi32>
    %290 = arith.andi %285, %289 : vector<4x32xi1>
    %cst_94 = arith.constant 1.000000e+00 : f32
    %cst_95 = arith.constant 0.000000e+00 : f32
    %291 = vector.broadcast %cst_94 : f32 to vector<4x32xf32>
    %292 = vector.broadcast %cst_95 : f32 to vector<4x32xf32>
    %293 = arith.select %290, %291, %292 : vector<4x32xi1>, vector<4x32xf32>
    %294 = arith.addf %283, %293 : vector<4x32xf32>
    %c2_i32 = arith.constant 2 : i32
    %295 = vector.broadcast %c2_i32 : i32 to vector<4x32xi32>
    %296 = arith.cmpi eq, %281, %295 : vector<4x32xi32>
    %c0_96 = arith.constant 0 : index
    %297 = memref.load %arg2[%c0_96] : memref<2xi32, #tpu.memory_space<smem>>
    %c0_i32_97 = arith.constant 0 : i32
    %298 = arith.addi %c0_i32_97, %297 : i32
    %299 = vector.broadcast %298 : i32 to vector<4x32xi32>
    %300 = arith.cmpi eq, %282, %299 : vector<4x32xi32>
    %301 = arith.andi %296, %300 : vector<4x32xi1>
    %cst_98 = arith.constant 1.000000e+00 : f32
    %cst_99 = arith.constant 0.000000e+00 : f32
    %302 = vector.broadcast %cst_98 : f32 to vector<4x32xf32>
    %303 = vector.broadcast %cst_99 : f32 to vector<4x32xf32>
    %304 = arith.select %301, %302, %303 : vector<4x32xi1>, vector<4x32xf32>
    %305 = arith.addf %294, %304 : vector<4x32xf32>
    %c1_i32 = arith.constant 1 : i32
    %306 = vector.broadcast %c1_i32 : i32 to vector<4x32xi32>
    %307 = arith.cmpi eq, %281, %306 : vector<4x32xi32>
    %c1_100 = arith.constant 1 : index
    %308 = memref.load %arg1[%c1_100] : memref<2xi32, #tpu.memory_space<smem>>
    %c16_i32 = arith.constant 16 : i32
    %309 = arith.addi %c16_i32, %308 : i32
    %310 = vector.broadcast %309 : i32 to vector<4x32xi32>
    %311 = arith.cmpi eq, %282, %310 : vector<4x32xi32>
    %312 = arith.andi %307, %311 : vector<4x32xi1>
    %cst_101 = arith.constant 1.000000e+00 : f32
    %cst_102 = arith.constant 0.000000e+00 : f32
    %313 = vector.broadcast %cst_101 : f32 to vector<4x32xf32>
    %314 = vector.broadcast %cst_102 : f32 to vector<4x32xf32>
    %315 = arith.select %312, %313, %314 : vector<4x32xi1>, vector<4x32xf32>
    %316 = arith.addf %305, %315 : vector<4x32xf32>
    %c3_i32 = arith.constant 3 : i32
    %317 = vector.broadcast %c3_i32 : i32 to vector<4x32xi32>
    %318 = arith.cmpi eq, %281, %317 : vector<4x32xi32>
    %c1_103 = arith.constant 1 : index
    %319 = memref.load %arg2[%c1_103] : memref<2xi32, #tpu.memory_space<smem>>
    %c16_i32_104 = arith.constant 16 : i32
    %320 = arith.addi %c16_i32_104, %319 : i32
    %321 = vector.broadcast %320 : i32 to vector<4x32xi32>
    %322 = arith.cmpi eq, %282, %321 : vector<4x32xi32>
    %323 = arith.andi %318, %322 : vector<4x32xi1>
    %cst_105 = arith.constant 1.000000e+00 : f32
    %cst_106 = arith.constant 0.000000e+00 : f32
    %324 = vector.broadcast %cst_105 : f32 to vector<4x32xf32>
    %325 = vector.broadcast %cst_106 : f32 to vector<4x32xf32>
    %326 = arith.select %323, %324, %325 : vector<4x32xi1>, vector<4x32xf32>
    %327 = arith.addf %316, %326 : vector<4x32xf32>
    %328 = arith.truncf %327 : vector<4x32xf32> to vector<4x32xbf16>
    %cst_107 = arith.constant dense<0.000000e+00> : vector<4x32xf32>
    %329 = tpu.matmul %328, %280, %cst_107 {dimension_numbers = #tpu.dot_dimension_numbers<[1], [0], [0], [1], [0, 0, 1, 1], [], []>} : vector<4x32xbf16>, vector<32x32xbf16>, vector<4x32xf32> -> vector<4x32xf32>
    %330 = vector.extract_strided_slice %329 {offsets = [0, 0], sizes = [2, 32], strides = [1, 1]} : vector<4x32xf32> to vector<2x32xf32>
    %331 = vector.extract_strided_slice %329 {offsets = [2, 0], sizes = [2, 32], strides = [1, 1]} : vector<4x32xf32> to vector<2x32xf32>
    %332 = tpu.concatenate %330, %331 in 1 : vector<2x32xf32>, vector<2x32xf32> -> vector<2x64xf32>
    %333 = arith.truncf %332 : vector<2x64xf32> to vector<2x64xbf16>
    %c320 = arith.constant 320 : index
    %c0_108 = arith.constant 0 : index
    %334 = vector.load %arg5[%c320, %c0_108] : memref<384x128xbf16, #tpu.memory_space<vmem>>, vector<64x128xbf16>
    %c18 = arith.constant 18 : index
    %c0_109 = arith.constant 0 : index
    %335 = vector.load %arg6[%c18, %c0_109] : memref<24x128xf32, #tpu.memory_space<vmem>>, vector<1x128xf32>
    %cst_110 = arith.constant dense<0.000000e+00> : vector<2x128xf32>
    %336 = tpu.matmul %333, %334, %cst_110 {dimension_numbers = #tpu.dot_dimension_numbers<[1], [0], [0], [1], [0, 0, 1, 1], [], []>} : vector<2x64xbf16>, vector<64x128xbf16>, vector<2x128xf32> -> vector<2x128xf32>
    %337 = vector.broadcast %335 : vector<1x128xf32> to vector<2x128xf32>
    %338 = arith.addf %336, %337 : vector<2x128xf32>
    %c0_111 = arith.constant 0 : index
    %c0_112 = arith.constant 0 : index
    %339 = vector.load %arg7[%c0_111, %c0_112] : memref<2x128xf32, #tpu.memory_space<vmem>>, vector<2x128xf32>
    tpu.vector_store %arg7[%c0_111, %c0_112], %338 {strides = array<i32>} : memref<2x128xf32, #tpu.memory_space<vmem>>, vector<2x128xf32>,
    return
  }
  func.func @transform_0(%arg0: i32, %arg1: memref<2xi32, #tpu.memory_space<smem>>, %arg2: memref<2xi32, #tpu.memory_space<smem>>) -> (i32, i32) {
    %c0_i32 = arith.constant 0 : i32
    %c0_i32_0 = arith.constant 0 : i32
    %c0_i32_1 = arith.constant 0 : i32
    return %c0_i32, %c0_i32_0 : i32, i32
  }
  func.func @transform_1(%arg0: i32, %arg1: memref<2xi32, #tpu.memory_space<smem>>, %arg2: memref<2xi32, #tpu.memory_space<smem>>) -> (i32, i32) {
    %c0_i32 = arith.constant 0 : i32
    %c0_i32_0 = arith.constant 0 : i32
    %c0_i32_1 = arith.constant 0 : i32
    return %c0_i32, %c0_i32_0 : i32, i32
  }
  func.func @transform_2(%arg0: i32, %arg1: memref<2xi32, #tpu.memory_space<smem>>, %arg2: memref<2xi32, #tpu.memory_space<smem>>) -> (i32, i32) {
    %c0_i32 = arith.constant 0 : i32
    %c0_i32_0 = arith.constant 0 : i32
    %c0_i32_1 = arith.constant 0 : i32
    return %c0_i32, %c0_i32_0 : i32, i32
  }
  func.func @transform_3(%arg0: i32, %arg1: memref<2xi32, #tpu.memory_space<smem>>, %arg2: memref<2xi32, #tpu.memory_space<smem>>) -> (i32, i32) {
    %c0_i32 = arith.constant 0 : i32
    %c0_i32_0 = arith.constant 0 : i32
    %c0_i32_1 = arith.constant 0 : i32
    return %c0_i32, %c0_i32_0 : i32, i32
  }
  func.func @transform_4(%arg0: i32, %arg1: memref<2xi32, #tpu.memory_space<smem>>, %arg2: memref<2xi32, #tpu.memory_space<smem>>) -> (i32, i32) {
    %c0_i32 = arith.constant 0 : i32
    %c0_i32_0 = arith.constant 0 : i32
    %c0_i32_1 = arith.constant 0 : i32
    return %c0_i32, %c0_i32_0 : i32, i32
  }
}

</mosaic_0001>

<llo_original>
// kernel: tpu_custom_call.1
$region0: #{tpu_custom_call.1}
  #allocation0 [shape = 'u32[]', space=smem, size = 0x4, offset = 0x4, fixed_abs, tag = 'smem constant byte address 0x4 - core index']
  #allocation1 [shape = 'u32[144,128]{1,0:T(1,128)}', space=vmem, size = 0x12000, scoped, tag = 'internal scratch']
  #allocation2 [shape = 's32[1]{0}', space=sflag, size = 0x4, scoped, tag = 'scoped memory for tpu_custom_call.1']
  #allocation3 [shape = 'u8[512]{0}', space=smem, size = 0x200, scoped, tag = 'prefetched SMEM operand 0']
  #allocation4 [shape = 'u8[512]{0}', space=smem, size = 0x200, scoped, tag = 'prefetched SMEM operand 1']
  %s0 = inlined_call_operand.hbm [shape: s32[2], index: 0, kind: input, shape index: {}]
  %s1 = inlined_call_operand.vmem [shape: s32[2], index: 1, kind: input, shape index: {}]
  %s2 = inlined_call_operand.hbm [shape: f32[32,32], index: 2, kind: input, shape index: {}]
  %s3 = inlined_call_operand.hbm [shape: f32[32,32], index: 3, kind: input, shape index: {}]
  %s4 = inlined_call_operand.hbm [shape: bf16[384,128], index: 4, kind: input, shape index: {}]
  %s5 = inlined_call_operand.hbm [shape: f32[24,128], index: 5, kind: input, shape index: {}]
  %s6 = inlined_call_operand.hbm [shape: f32[2,128], index: 6, kind: output, shape index: {}]
  %s7 = sld [smem:[#allocation0]]
  $region42: #{tpu_custom_call.1} parent=0
    _
  %s9 = ssub.s32 1, %s7
  %s10 = scalar_select 0, %s9, %s7
  %12 = dma.hbm_to_smem %s0, 16, [#allocation3], [#allocation2]
  %s13 = sshll.u32 %s1, 4
  %s14 = int_to_ptr.vmem [resolvable:$true] %s13
  %16 = dma.vmem_to_smem %s14, 16, [#allocation4], [#allocation2]
  %17 = dma.done [#allocation2], 32
  %18 = sfence
  $region1: #{tpu_custom_call.1} parent=0
    #allocation5 [shape = 'u8[16384]{0}', space=vmem, size = 0x4000, scoped, tag = 'input window, operand 2, single buffered']
    #allocation6 [shape = 's32[1]{0}', space=sflag, size = 0x4, scoped, tag = 'scoped memory for tpu_custom_call.1']
    #allocation7 [shape = 's32[1]{0}', space=sflag, size = 0x4, scoped, tag = 'scoped memory for tpu_custom_call.1']
    #allocation8 [shape = 'u8[16384]{0}', space=vmem, size = 0x4000, scoped, tag = 'input window, operand 3, single buffered']
    #allocation9 [shape = 's32[1]{0}', space=sflag, size = 0x4, scoped, tag = 'scoped memory for tpu_custom_call.1']
    #allocation10 [shape = 'u8[98304]{0}', space=vmem, size = 0x18000, scoped, tag = 'input window, operand 4, single buffered']
    #allocation11 [shape = 'u8[12288]{0}', space=vmem, size = 0x3000, scoped, tag = 'input window, operand 5, single buffered']
    #allocation12 [shape = 's32[1]{0}', space=sflag, size = 0x4, scoped, tag = 'scoped memory for tpu_custom_call.1']
    #allocation13 [shape = 'u8[1024]{0}', space=vmem, size = 0x400, scoped, tag = 'output window, operand 0, single buffered']
    %19 = vsyncpa [#allocation6], 0
    %20 = vsyncpa [#allocation9], 0
    %21 = vsyncpa [#allocation12], 0
    %22 = vsyncpa [#allocation7], 0
    // Predicated region
    $region2: #{tpu_custom_call.1} parent=1 // pred_check
      _
    $region3: #{tpu_custom_call.1} parent=1 // pred_check_branch
      %24 = sbr.rel (0) target = $region5
    $region4: #{tpu_custom_call.1} parent=1 // pred_region
      %s26 = ssub.s32 512, 512
      %27 = vsyncadd [#allocation6], %s26
      %s28 = sshll.u32 [#allocation5], 4
      %s29 = int_to_ptr.vmem [resolvable:$true] %s28
      %34 = dma.hbm_to_vmem [thread:$0]  %s2, 512, %s29, [#allocation6], 128, 128, 8
    $region5: #{tpu_custom_call.1} parent=1 // pred_fallthru
      _
    // Predicated region
    $region6: #{tpu_custom_call.1} parent=1 // pred_check
      _
    $region7: #{tpu_custom_call.1} parent=1 // pred_check_branch
      %36 = sbr.rel (0) target = $region9
    $region8: #{tpu_custom_call.1} parent=1 // pred_region
      %s38 = ssub.s32 512, 512
      %39 = vsyncadd [#allocation9], %s38
      %s40 = sshll.u32 [#allocation8], 4
      %s41 = int_to_ptr.vmem [resolvable:$true] %s40
      %46 = dma.hbm_to_vmem [thread:$0]  %s3, 512, %s41, [#allocation9], 128, 128, 8
    $region9: #{tpu_custom_call.1} parent=1 // pred_fallthru
      _
    // Predicated region
    $region10: #{tpu_custom_call.1} parent=1 // pred_check
      _
    $region11: #{tpu_custom_call.1} parent=1 // pred_check_branch
      %48 = sbr.rel (0) target = $region13
    $region12: #{tpu_custom_call.1} parent=1 // pred_region
      %s50 = ssub.s32 3072, 3072
      %51 = vsyncadd [#allocation9], %s50
      %s52 = sshll.u32 [#allocation10], 4
      %s53 = int_to_ptr.vmem [resolvable:$true] %s52
      %58 = dma.hbm_to_vmem [thread:$0]  %s4, 3072, %s53, [#allocation9], 64, 64, 4
    $region13: #{tpu_custom_call.1} parent=1 // pred_fallthru
      _
    // Predicated region
    $region14: #{tpu_custom_call.1} parent=1 // pred_check
      _
    $region15: #{tpu_custom_call.1} parent=1 // pred_check_branch
      %60 = sbr.rel (0) target = $region17
    $region16: #{tpu_custom_call.1} parent=1 // pred_region
      %s62 = ssub.s32 384, 384
      %63 = vsyncadd [#allocation12], %s62
      %s64 = sshll.u32 [#allocation11], 4
      %s65 = int_to_ptr.vmem [resolvable:$true] %s64
      %70 = dma.hbm_to_vmem [thread:$0]  %s5, 384, %s65, [#allocation12], 128, 128, 8
    $region17: #{tpu_custom_call.1} parent=1 // pred_fallthru
      _
    // Predicated region
    $region18: #{tpu_custom_call.1} parent=1 // pred_check
      _
    $region19: #{tpu_custom_call.1} parent=1 // pred_check_branch
      %72 = sbr.rel (0) target = $region21
    $region20: #{tpu_custom_call.1} parent=1 // pred_region
      %73 = dma.done [#allocation6], 512
    $region21: #{tpu_custom_call.1} parent=1 // pred_fallthru
      _
    // Predicated region
    $region22: #{tpu_custom_call.1} parent=1 // pred_check
      _
    $region23: #{tpu_custom_call.1} parent=1 // pred_check_branch
      %75 = sbr.rel (0) target = $region25
    $region24: #{tpu_custom_call.1} parent=1 // pred_region
      %76 = dma.done [#allocation9], 512
    $region25: #{tpu_custom_call.1} parent=1 // pred_fallthru
      _
    // Predicated region
    $region26: #{tpu_custom_call.1} parent=1 // pred_check
      _
    $region27: #{tpu_custom_call.1} parent=1 // pred_check_branch
      %78 = sbr.rel (0) target = $region29
    $region28: #{tpu_custom_call.1} parent=1 // pred_region
      %79 = dma.done [#allocation9], 3072
    $region29: #{tpu_custom_call.1} parent=1 // pred_fallthru
      _
    // Predicated region
    $region30: #{tpu_custom_call.1} parent=1 // pred_check
      _
    $region31: #{tpu_custom_call.1} parent=1 // pred_check_branch
      %81 = sbr.rel (0) target = $region33
    $region32: #{tpu_custom_call.1} parent=1 // pred_region
      %82 = dma.done [#allocation12], 384
    $region33: #{tpu_custom_call.1} parent=1 // pred_fallthru
      _
    %v84 = vld [vmem:[#allocation8] sm:$0xff]
    %v85 = vld [vmem:[#allocation8 + $0x8] sm:$0xff]
    %v86 = vld [vmem:[#allocation8 + $0x10] sm:$0xff]
    %v87 = vld [vmem:[#allocation8 + $0x18] sm:$0xff]
    %v88 = vld [vmem:[#allocation11 + $0x10] sm:$0x1]
    %v89 = vld [vmem:[#allocation11 + $0x11] sm:$0x1]
    %v90 = vld [vmem:[#allocation5] sm:$0xff]
    %v91 = vld [vmem:[#allocation5 + $0x8] sm:$0xff]
    %v92 = vld [vmem:[#allocation5 + $0x10] sm:$0xff]
    %v93 = vld [vmem:[#allocation5 + $0x18] sm:$0xff]
    %vm94 = vcmask 261120
    %v95 = vsel %vm94, %v90, 0.0
    %96 = vadd.xlane.f32.xlu0 %v95
    %v97 = vpop.xlane.xlu0 %96
    %v98 = vsel %vm94, %v91, 0.0
    %99 = vadd.xlane.f32.xlu0 %v98
    %v100 = vpop.xlane.xlu0 %99
    %v101 = vsel %vm94, %v92, 0.0
    %102 = vadd.xlane.f32.xlu0 %v101
    %v103 = vpop.xlane.xlu0 %102
    %v104 = vsel %vm94, %v93, 0.0
    %105 = vadd.xlane.f32.xlu0 %v104
    %v106 = vpop.xlane.xlu0 %105
    %v107 = vrcp.pop 32.0
    %v108 = vmul.f32 %v97, %v107
    %v109 = vmul.f32 %v100, %v107
    %v110 = vmul.f32 %v103, %v107
    %v111 = vmul.f32 %v106, %v107
    %v112 = vsub.f32 %v90, %v108
    %v113 = vsub.f32 %v91, %v109
    %v114 = vsub.f32 %v92, %v110
    %v115 = vsub.f32 %v93, %v111
    %v116 = vmul.f32 %v112, %v112
    %v117 = vmul.f32 %v113, %v113
    %v118 = vmul.f32 %v114, %v114
    %v119 = vmul.f32 %v115, %v115
    %v120 = vsel %vm94, %v116, 0.0
    %121 = vadd.xlane.f32.xlu0 %v120
    %v122 = vpop.xlane.xlu0 %121
    %v123 = vsel %vm94, %v117, 0.0
    %124 = vadd.xlane.f32.xlu0 %v123
    %v125 = vpop.xlane.xlu0 %124
    %v126 = vsel %vm94, %v118, 0.0
    %127 = vadd.xlane.f32.xlu0 %v126
    %v128 = vpop.xlane.xlu0 %127
    %v129 = vsel %vm94, %v119, 0.0
    %130 = vadd.xlane.f32.xlu0 %v129
    %v131 = vpop.xlane.xlu0 %130
    %v132 = vmul.f32 %v122, %v107
    %v133 = vmul.f32 %v125, %v107
    %v134 = vmul.f32 %v128, %v107
    %v135 = vmul.f32 %v131, %v107
    %v136 = vadd.f32 %v132, 1e-12
    %v137 = vadd.f32 %v133, 1e-12
    %v138 = vadd.f32 %v134, 1e-12
    %v139 = vadd.f32 %v135, 1e-12
    %v140 = vrsqrt.pop %v136
    %v141 = vrsqrt.pop %v137
    %v142 = vrsqrt.pop %v138
    %v143 = vrsqrt.pop %v139
    %v144 = vmul.f32 %v112, %v140
    %v145 = vmul.f32 %v113, %v141
    %v146 = vmul.f32 %v114, %v142
    %v147 = vmul.f32 %v115, %v143
    %v148 = vlaneseq
    %v149 = vshrl.u32 %v148, 7
    %v150 = vsub.s32 0, %v149
    %v151 = vrot.slane %v88, %v150
    %v152 = vmul.f32 %v144, %v151
    %v153 = vmul.f32 %v145, %v151
    %v154 = vmul.f32 %v146, %v151
    %v155 = vmul.f32 %v147, %v151
    %v156 = vlaneseq
    %v157 = vshrl.u32 %v156, 7
    %v158 = vsub.s32 0, %v157
    %v159 = vrot.slane %v89, %v158
    %v160 = vadd.f32 %v152, %v159
    %v161 = vadd.f32 %v153, %v159
    %v162 = vadd.f32 %v154, %v159
    %v163 = vadd.f32 %v155, %v159
    %v164 = vpack.c.bf16 %v161, %v160
    %v165 = vpack.c.bf16 %v163, %v162
    %v166 = vld [vmem:[#allocation10] sm:$0xf]
    %v167 = vld [vmem:[#allocation10 + $0x4] sm:$0xf]
    %v168 = vld [vmem:[#allocation10 + $0x8] sm:$0xf]
    %v169 = vld [vmem:[#allocation10 + $0xc] sm:$0xf]
    %v170 = vld [vmem:[#allocation11] sm:$0x1]
    %v171 = vlaneseq
    %v172 = vshrl.u32 %v171, 7
    %v173 = vsub.s32 0, %v172
    %v174 = vrot.slane %v170, %v173
    %v179 = vunpack.c.l.b16 %v166
    %v180 = vunpack.c.l.b16 %v167
    %v181 = vunpack.c.l.b16 %v168
    %v182 = vunpack.c.l.b16 %v169
    %v183 = vpack.c.b16 %v180, %v179
    %v184 = vpack.c.b16 %v182, %v181
    %v188 = vsel %vm94, %v164, 0
    %v191 = vsel %vm94, %v165, 0
    %193 = vmatprep.subr.bf16.mxu0 0
    %194 = vmatpush1.bf16.msra.mxu0 %v183
    %195 = vmatprep.subr.bf16.mxu0 0
    %196 = vmatpush1.bf16.msra.mxu0 %v184
    %197 = vmatprep.subr.bf16.mxu0 0
    %198 = vmatpush1.bf16.msra.mxu0 0
    %199 = vmatprep.subr.bf16.mxu0 0
    %200 = vmatpush1.bf16.msra.mxu0 0
    %201 = vmatprep.subr.bf16.mxu0 0
    %202 = vmatpush1.bf16.msra.mxu0 0
    %203 = vmatprep.subr.bf16.mxu0 0
    %204 = vmatpush1.bf16.msra.mxu0 0
    %205 = vmatprep.subr.bf16.mxu0 0
    %206 = vmatpush1.bf16.msra.mxu0 0
    %207 = vmatprep.subr.bf16.mxu0 0
    %208 = vmatpush1.bf16.msra.mxu0 0
    %209 = vmatprep.subr.bf16.mxu0 0
    %210 = vmatpush1.bf16.msra.mxu0 0
    %211 = vmatprep.subr.bf16.mxu0 0
    %212 = vmatpush1.bf16.msra.mxu0 0
    %213 = vmatprep.subr.bf16.mxu0 0
    %214 = vmatpush1.bf16.msra.mxu0 0
    %215 = vmatprep.subr.bf16.mxu0 0
    %216 = vmatpush1.bf16.msra.mxu0 0
    %217 = vmatprep.subr.bf16.mxu0 0
    %218 = vmatpush1.bf16.msra.mxu0 0
    %219 = vmatprep.subr.bf16.mxu0 0
    %220 = vmatpush1.bf16.msra.mxu0 0
    %221 = vmatprep.subr.bf16.mxu0 0
    %222 = vmatpush1.bf16.msra.mxu0 0
    %223 = vmatprep.subr.bf16.mxu0 0
    %224 = vmatpush1.bf16.msra.mxu0 0
    %225 = vmatprep.mubr.bf16.mxu0 0
    %226 = vmatmul.mubr.bf16.gmra.mrb[0].mxu0 %v188
    %v227 = vpop.f32.mrb[0].mxu0
    %v228 = vadd.f32 %v174, %v227
    %v229 = vpop.f32.mrb[0].mxu0
    %v230 = vpop.f32.mrb[0].mxu0
    %v231 = vadd.f32 %v174, %v230
    %v232 = vpop.f32.mrb[0].mxu0
    %233 = vmatprep.mubr.bf16.mxu0 0
    %234 = vmatmul.mubr.bf16.gmra.mrb[0].mxu0 %v191
    %v235 = vpop.f32.mrb[0].mxu0
    %v236 = vadd.f32 %v174, %v235
    %v237 = vpop.f32.mrb[0].mxu0
    %v238 = vpop.f32.mrb[0].mxu0
    %v239 = vadd.f32 %v174, %v238
    %v240 = vpop.f32.mrb[0].mxu0
    %241 = vdwg.mxu0
    %v242 = vpack.c.bf16 %v231, %v228
    %v243 = vpack.c.bf16 %v239, %v236
    %246 = vrot.lane.b32.xlu0 %v242, 96
    %v247 = vpop.permute.xlu0 %246
    %248 = vrot.lane.b32.xlu0 %v243, 96
    %v249 = vpop.permute.xlu0 %248
    %vm250 = vcmask 130048
    %v252 = vsel %vm250, %v242, 0
    %v255 = vsel %vm250, %v243, 0
    %v258 = vsel %vm250, %v247, 0
    %v261 = vsel %vm250, %v249, 0
    %263 = vmatprep.subr.bf16.mxu0 0
    %264 = vmatpush1.bf16.xpose.msra.mxu0 %v258
    %265 = vmatprep.subr.bf16.mxu0 0
    %266 = vmatpush1.bf16.xpose.msra.mxu0 %v261
    %267 = vmatprep.subr.bf16.mxu0 0
    %268 = vmatpush1.bf16.xpose.msra.mxu0 0
    %269 = vmatprep.subr.bf16.mxu0 0
    %270 = vmatpush1.bf16.xpose.msra.mxu0 0
    %271 = vmatprep.subr.bf16.mxu0 0
    %272 = vmatpush1.bf16.xpose.msra.mxu0 0
    %273 = vmatprep.subr.bf16.mxu0 0
    %274 = vmatpush1.bf16.xpose.msra.mxu0 0
    %275 = vmatprep.subr.bf16.mxu0 0
    %276 = vmatpush1.bf16.xpose.msra.mxu0 0
    %277 = vmatprep.subr.bf16.mxu0 0
    %278 = vmatpush1.bf16.xpose.msra.mxu0 0
    %279 = vmatprep.subr.bf16.mxu0 0
    %280 = vmatpush1.bf16.xpose.msra.mxu0 0
    %281 = vmatprep.subr.bf16.mxu0 0
    %282 = vmatpush1.bf16.xpose.msra.mxu0 0
    %283 = vmatprep.subr.bf16.mxu0 0
    %284 = vmatpush1.bf16.xpose.msra.mxu0 0
    %285 = vmatprep.subr.bf16.mxu0 0
    %286 = vmatpush1.bf16.xpose.msra.mxu0 0
    %287 = vmatprep.subr.bf16.mxu0 0
    %288 = vmatpush1.bf16.xpose.msra.mxu0 0
    %289 = vmatprep.subr.bf16.mxu0 0
    %290 = vmatpush1.bf16.xpose.msra.mxu0 0
    %291 = vmatprep.subr.bf16.mxu0 0
    %292 = vmatpush1.bf16.xpose.msra.mxu0 0
    %293 = vmatprep.subr.bf16.mxu0 0
    %294 = vmatpush1.bf16.xpose.msra.mxu0 0
    %295 = vmatprep.mubr.bf16.mxu0 0
    %296 = vmatmul.mubr.bf16.gmra.mrb[0].mxu0 %v252
    %v297 = vpop.f32.mrb[0].mxu0
    %v298 = vadd.f32 0.0, %v297
    %v299 = vpop.f32.mrb[0].mxu0
    %v300 = vpop.f32.mrb[0].mxu0
    %v301 = vadd.f32 0.0, %v300
    %v302 = vpop.f32.mrb[0].mxu0
    %303 = vmatprep.mubr.bf16.mxu0 0
    %304 = vmatmul.mubr.bf16.gmra.mrb[0].mxu0 %v255
    %v305 = vpop.f32.mrb[0].mxu0
    %v306 = vadd.f32 0.0, %v305
    %v307 = vpop.f32.mrb[0].mxu0
    %v308 = vpop.f32.mrb[0].mxu0
    %v309 = vadd.f32 0.0, %v308
    %v310 = vpop.f32.mrb[0].mxu0
    %311 = vdwg.mxu0
    %v312 = vmul.f32 %v298, 0.25
    %v313 = vmul.f32 %v301, 0.25
    %v314 = vmul.f32 %v306, 0.25
    %v315 = vmul.f32 %v309, 0.25
    %v316 = vadd.f32 %v312, %v84
    %v317 = vadd.f32 %v313, %v85
    %v318 = vadd.f32 %v314, %v86
    %v319 = vadd.f32 %v315, %v87
    %v320 = vsel %vm94, %v316, -inf
    %321 = vmax.xlane.f32.xlu0 %v320
    %v322 = vpop.xlane.xlu0 %321
    %v323 = vsel %vm94, %v317, -inf
    %324 = vmax.xlane.f32.xlu0 %v323
    %v325 = vpop.xlane.xlu0 %324
    %v326 = vsel %vm94, %v318, -inf
    %327 = vmax.xlane.f32.xlu0 %v326
    %v328 = vpop.xlane.xlu0 %327
    %v329 = vsel %vm94, %v319, -inf
    %330 = vmax.xlane.f32.xlu0 %v329
    %v331 = vpop.xlane.xlu0 %330
    %v332 = vsub.f32 %v316, %v322
    %v333 = vsub.f32 %v317, %v325
    %v334 = vsub.f32 %v318, %v328
    %v335 = vsub.f32 %v319, %v331
    %v336 = vmul.f32 %v332, 1.442695
    %v337 = vpow.pop %v336
    %v338 = vmul.f32 %v333, 1.442695
    %v339 = vpow.pop %v338
    %v340 = vmul.f32 %v334, 1.442695
    %v341 = vpow.pop %v340
    %v342 = vmul.f32 %v335, 1.442695
    %v343 = vpow.pop %v342
    %v344 = vsel %vm94, %v337, 0.0
    %345 = vadd.xlane.f32.xlu0 %v344
    %v346 = vpop.xlane.xlu0 %345
    %v347 = vsel %vm94, %v339, 0.0
    %348 = vadd.xlane.f32.xlu0 %v347
    %v349 = vpop.xlane.xlu0 %348
    %v350 = vsel %vm94, %v341, 0.0
    %351 = vadd.xlane.f32.xlu0 %v350
    %v352 = vpop.xlane.xlu0 %351
    %v353 = vsel %vm94, %v343, 0.0
    %354 = vadd.xlane.f32.xlu0 %v353
    %v355 = vpop.xlane.xlu0 %354
    %v356 = vrcp.pop %v346
    %v357 = vrcp.pop %v349
    %v358 = vrcp.pop %v352
    %v359 = vrcp.pop %v355
    %v360 = vmul.f32 %v337, %v356
    %v361 = vmul.f32 %v339, %v357
    %v362 = vmul.f32 %v341, %v358
    %v363 = vmul.f32 %v343, %v359
    %v364 = vpack.c.bf16 %v361, %v360
    %v365 = vpack.c.bf16 %v363, %v362
    %366 = vrot.lane.b32.xlu0 %v242, 64
    %v367 = vpop.permute.xlu0 %366
    %368 = vrot.lane.b32.xlu0 %v243, 64
    %v369 = vpop.permute.xlu0 %368
    %v373 = vsel %vm94, %v364, 0
    %v376 = vsel %vm94, %v365, 0
    %378 = vmatprep.subr.bf16.mxu0 0
    %379 = vmatpush1.bf16.msra.mxu0 %v367
    %380 = vmatprep.subr.bf16.mxu0 0
    %381 = vmatpush1.bf16.msra.mxu0 %v369
    %382 = vmatprep.subr.bf16.mxu0 0
    %383 = vmatpush1.bf16.msra.mxu0 0
    %384 = vmatprep.subr.bf16.mxu0 0
    %385 = vmatpush1.bf16.msra.mxu0 0
    %386 = vmatprep.subr.bf16.mxu0 0
    %387 = vmatpush1.bf16.msra.mxu0 0
    %388 = vmatprep.subr.bf16.mxu0 0
    %389 = vmatpush1.bf16.msra.mxu0 0
    %390 = vmatprep.subr.bf16.mxu0 0
    %391 = vmatpush1.bf16.msra.mxu0 0
    %392 = vmatprep.subr.bf16.mxu0 0
    %393 = vmatpush1.bf16.msra.mxu0 0
    %394 = vmatprep.subr.bf16.mxu0 0
    %395 = vmatpush1.bf16.msra.mxu0 0
    %396 = vmatprep.subr.bf16.mxu0 0
    %397 = vmatpush1.bf16.msra.mxu0 0
    %398 = vmatprep.subr.bf16.mxu0 0
    %399 = vmatpush1.bf16.msra.mxu0 0
    %400 = vmatprep.subr.bf16.mxu0 0
    %401 = vmatpush1.bf16.msra.mxu0 0
    %402 = vmatprep.subr.bf16.mxu0 0
    %403 = vmatpush1.bf16.msra.mxu0 0
    %404 = vmatprep.subr.bf16.mxu0 0
    %405 = vmatpush1.bf16.msra.mxu0 0
    %406 = vmatprep.subr.bf16.mxu0 0
    %407 = vmatpush1.bf16.msra.mxu0 0
    %408 = vmatprep.subr.bf16.mxu0 0
    %409 = vmatpush1.bf16.msra.mxu0 0
    %410 = vmatprep.mubr.bf16.mxu0 0
    %411 = vmatmul.mubr.bf16.gmra.mrb[0].mxu0 %v373
    %v412 = vpop.f32.mrb[0].mxu0
    %v413 = vadd.f32 0.0, %v412
    %v414 = vpop.f32.mrb[0].mxu0
    %v415 = vpop.f32.mrb[0].mxu0
    %v416 = vadd.f32 0.0, %v415
    %v417 = vpop.f32.mrb[0].mxu0
    %418 = vmatprep.mubr.bf16.mxu0 0
    %419 = vmatmul.mubr.bf16.gmra.mrb[0].mxu0 %v376
    %v420 = vpop.f32.mrb[0].mxu0
    %v421 = vadd.f32 0.0, %v420
    %v422 = vpop.f32.mrb[0].mxu0
    %v423 = vpop.f32.mrb[0].mxu0
    %v424 = vadd.f32 0.0, %v423
    %v425 = vpop.f32.mrb[0].mxu0
    %426 = vdwg.mxu0
    %427 = vrot.lane.b32.xlu0 %v242, 112
    %v428 = vpop.permute.xlu0 %427
    %429 = vrot.lane.b32.xlu0 %v243, 112
    %v430 = vpop.permute.xlu0 %429
    %431 = vrot.lane.b32.xlu0 %v242, 80
    %v432 = vpop.permute.xlu0 %431
    %433 = vrot.lane.b32.xlu0 %v243, 80
    %v434 = vpop.permute.xlu0 %433
    %v436 = vsel %vm250, %v428, 0
    %v439 = vsel %vm250, %v430, 0
    %v442 = vsel %vm250, %v432, 0
    %v445 = vsel %vm250, %v434, 0
    %447 = vmatprep.subr.bf16.mxu0 0
    %448 = vmatpush1.bf16.xpose.msra.mxu0 %v442
    %449 = vmatprep.subr.bf16.mxu0 0
    %450 = vmatpush1.bf16.xpose.msra.mxu0 %v445
    %451 = vmatprep.subr.bf16.mxu0 0
    %452 = vmatpush1.bf16.xpose.msra.mxu0 0
    %453 = vmatprep.subr.bf16.mxu0 0
    %454 = vmatpush1.bf16.xpose.msra.mxu0 0
    %455 = vmatprep.subr.bf16.mxu0 0
    %456 = vmatpush1.bf16.xpose.msra.mxu0 0
    %457 = vmatprep.subr.bf16.mxu0 0
    %458 = vmatpush1.bf16.xpose.msra.mxu0 0
    %459 = vmatprep.subr.bf16.mxu0 0
    %460 = vmatpush1.bf16.xpose.msra.mxu0 0
    %461 = vmatprep.subr.bf16.mxu0 0
    %462 = vmatpush1.bf16.xpose.msra.mxu0 0
    %463 = vmatprep.subr.bf16.mxu0 0
    %464 = vmatpush1.bf16.xpose.msra.mxu0 0
    %465 = vmatprep.subr.bf16.mxu0 0
    %466 = vmatpush1.bf16.xpose.msra.mxu0 0
    %467 = vmatprep.subr.bf16.mxu0 0
    %468 = vmatpush1.bf16.xpose.msra.mxu0 0
    %469 = vmatprep.subr.bf16.mxu0 0
    %470 = vmatpush1.bf16.xpose.msra.mxu0 0
    %471 = vmatprep.subr.bf16.mxu0 0
    %472 = vmatpush1.bf16.xpose.msra.mxu0 0
    %473 = vmatprep.subr.bf16.mxu0 0
    %474 = vmatpush1.bf16.xpose.msra.mxu0 0
    %475 = vmatprep.subr.bf16.mxu0 0
    %476 = vmatpush1.bf16.xpose.msra.mxu0 0
    %477 = vmatprep.subr.bf16.mxu0 0
    %478 = vmatpush1.bf16.xpose.msra.mxu0 0
    %479 = vmatprep.mubr.bf16.mxu0 0
    %480 = vmatmul.mubr.bf16.gmra.mrb[0].mxu0 %v436
    %v481 = vpop.f32.mrb[0].mxu0
    %v482 = vadd.f32 0.0, %v481
    %v483 = vpop.f32.mrb[0].mxu0
    %v484 = vpop.f32.mrb[0].mxu0
    %v485 = vadd.f32 0.0, %v484
    %v486 = vpop.f32.mrb[0].mxu0
    %487 = vmatprep.mubr.bf16.mxu0 0
    %488 = vmatmul.mubr.bf16.gmra.mrb[0].mxu0 %v439
    %v489 = vpop.f32.mrb[0].mxu0
    %v490 = vadd.f32 0.0, %v489
    %v491 = vpop.f32.mrb[0].mxu0
    %v492 = vpop.f32.mrb[0].mxu0
    %v493 = vadd.f32 0.0, %v492
    %v494 = vpop.f32.mrb[0].mxu0
    %495 = vdwg.mxu0
    %v496 = vmul.f32 %v482, 0.25
    %v497 = vmul.f32 %v485, 0.25
    %v498 = vmul.f32 %v490, 0.25
    %v499 = vmul.f32 %v493, 0.25
    %v500 = vadd.f32 %v496, %v84
    %v501 = vadd.f32 %v497, %v85
    %v502 = vadd.f32 %v498, %v86
    %v503 = vadd.f32 %v499, %v87
    %v504 = vsel %vm94, %v500, -inf
    %505 = vmax.xlane.f32.xlu0 %v504
    %v506 = vpop.xlane.xlu0 %505
    %v507 = vsel %vm94, %v501, -inf
    %508 = vmax.xlane.f32.xlu0 %v507
    %v509 = vpop.xlane.xlu0 %508
    %v510 = vsel %vm94, %v502, -inf
    %511 = vmax.xlane.f32.xlu0 %v510
    %v512 = vpop.xlane.xlu0 %511
    %v513 = vsel %vm94, %v503, -inf
    %514 = vmax.xlane.f32.xlu0 %v513
    %v515 = vpop.xlane.xlu0 %514
    %v516 = vsub.f32 %v500, %v506
    %v517 = vsub.f32 %v501, %v509
    %v518 = vsub.f32 %v502, %v512
    %v519 = vsub.f32 %v503, %v515
    %v520 = vmul.f32 %v516, 1.442695
    %v521 = vpow.pop %v520
    %v522 = vmul.f32 %v517, 1.442695
    %v523 = vpow.pop %v522
    %v524 = vmul.f32 %v518, 1.442695
    %v525 = vpow.pop %v524
    %v526 = vmul.f32 %v519, 1.442695
    %v527 = vpow.pop %v526
    %v528 = vsel %vm94, %v521, 0.0
    %529 = vadd.xlane.f32.xlu0 %v528
    %v530 = vpop.xlane.xlu0 %529
    %v531 = vsel %vm94, %v523, 0.0
    %532 = vadd.xlane.f32.xlu0 %v531
    %v533 = vpop.xlane.xlu0 %532
    %v534 = vsel %vm94, %v525, 0.0
    %535 = vadd.xlane.f32.xlu0 %v534
    %v536 = vpop.xlane.xlu0 %535
    %v537 = vsel %vm94, %v527, 0.0
    %538 = vadd.xlane.f32.xlu0 %v537
    %v539 = vpop.xlane.xlu0 %538
    %v540 = vrcp.pop %v530
    %v541 = vrcp.pop %v533
    %v542 = vrcp.pop %v536
    %v543 = vrcp.pop %v539
    %v544 = vmul.f32 %v521, %v540
    %v545 = vmul.f32 %v523, %v541
    %v546 = vmul.f32 %v525, %v542
    %v547 = vmul.f32 %v527, %v543
    %v548 = vpack.c.bf16 %v545, %v544
    %v549 = vpack.c.bf16 %v547, %v546
    %550 = vrot.lane.b32.xlu0 %v242, 48
    %v551 = vpop.permute.xlu0 %550
    %552 = vrot.lane.b32.xlu0 %v243, 48
    %v553 = vpop.permute.xlu0 %552
    %v557 = vsel %vm94, %v548, 0
    %v560 = vsel %vm94, %v549, 0
    %562 = vmatprep.subr.bf16.mxu0 0
    %563 = vmatpush1.bf16.msra.mxu0 %v551
    %564 = vmatprep.subr.bf16.mxu0 0
    %565 = vmatpush1.bf16.msra.mxu0 %v553
    %566 = vmatprep.subr.bf16.mxu0 0
    %567 = vmatpush1.bf16.msra.mxu0 0
    %568 = vmatprep.subr.bf16.mxu0 0
    %569 = vmatpush1.bf16.msra.mxu0 0
    %570 = vmatprep.subr.bf16.mxu0 0
    %571 = vmatpush1.bf16.msra.mxu0 0
    %572 = vmatprep.subr.bf16.mxu0 0
    %573 = vmatpush1.bf16.msra.mxu0 0
    %574 = vmatprep.subr.bf16.mxu0 0
    %575 = vmatpush1.bf16.msra.mxu0 0
    %576 = vmatprep.subr.bf16.mxu0 0
    %577 = vmatpush1.bf16.msra.mxu0 0
    %578 = vmatprep.subr.bf16.mxu0 0
    %579 = vmatpush1.bf16.msra.mxu0 0
    %580 = vmatprep.subr.bf16.mxu0 0
    %581 = vmatpush1.bf16.msra.mxu0 0
    %582 = vmatprep.subr.bf16.mxu0 0
    %583 = vmatpush1.bf16.msra.mxu0 0
    %584 = vmatprep.subr.bf16.mxu0 0
    %585 = vmatpush1.bf16.msra.mxu0 0
    %586 = vmatprep.subr.bf16.mxu0 0
    %587 = vmatpush1.bf16.msra.mxu0 0
    %588 = vmatprep.subr.bf16.mxu0 0
    %589 = vmatpush1.bf16.msra.mxu0 0
    %590 = vmatprep.subr.bf16.mxu0 0
    %591 = vmatpush1.bf16.msra.mxu0 0
    %592 = vmatprep.subr.bf16.mxu0 0
    %593 = vmatpush1.bf16.msra.mxu0 0
    %594 = vmatprep.mubr.bf16.mxu0 0
    %595 = vmatmul.mubr.bf16.gmra.mrb[0].mxu0 %v557
    %v596 = vpop.f32.mrb[0].mxu0
    %v597 = vadd.f32 0.0, %v596
    %v598 = vpop.f32.mrb[0].mxu0
    %v599 = vpop.f32.mrb[0].mxu0
    %v600 = vadd.f32 0.0, %v599
    %v601 = vpop.f32.mrb[0].mxu0
    %602 = vmatprep.mubr.bf16.mxu0 0
    %603 = vmatmul.mubr.bf16.gmra.mrb[0].mxu0 %v560
    %v604 = vpop.f32.mrb[0].mxu0
    %v605 = vadd.f32 0.0, %v604
    %v606 = vpop.f32.mrb[0].mxu0
    %v607 = vpop.f32.mrb[0].mxu0
    %v608 = vadd.f32 0.0, %v607
    %v609 = vpop.f32.mrb[0].mxu0
    %610 = vdwg.mxu0
    %615 = vrot.lane.b32.xlu0 %v597, 16
    %v616 = vpop.permute.xlu0 %615
    %617 = vrot.lane.b32.xlu0 %v600, 16
    %v618 = vpop.permute.xlu0 %617
    %619 = vrot.lane.b32.xlu0 %v605, 16
    %v620 = vpop.permute.xlu0 %619
    %621 = vrot.lane.b32.xlu0 %v608, 16
    %v622 = vpop.permute.xlu0 %621
    %v627 = vsel %vm250, %v413, %v616
    %v628 = vsel %vm250, %v416, %v618
    %v629 = vsel %vm250, %v421, %v620
    %v630 = vsel %vm250, %v424, %v622
    %v631 = vpack.c.bf16 %v628, %v627
    %v632 = vpack.c.bf16 %v630, %v629
    %v633 = vld [vmem:[#allocation10 + $0x10] sm:$0xf]
    %v634 = vld [vmem:[#allocation10 + $0x14] sm:$0xf]
    %v635 = vld [vmem:[#allocation10 + $0x18] sm:$0xf]
    %v636 = vld [vmem:[#allocation10 + $0x1c] sm:$0xf]
    %v637 = vld [vmem:[#allocation11 + $0x1] sm:$0x1]
    %v638 = vlaneseq
    %v639 = vshrl.u32 %v638, 7
    %v640 = vsub.s32 0, %v639
    %v641 = vrot.slane %v637, %v640
    %v646 = vunpack.c.l.b16 %v633
    %v647 = vunpack.c.l.b16 %v634
    %v648 = vunpack.c.l.b16 %v635
    %v649 = vunpack.c.l.b16 %v636
    %v650 = vpack.c.b16 %v647, %v646
    %v651 = vpack.c.b16 %v649, %v648
    %v655 = vsel %vm94, %v631, 0
    %v658 = vsel %vm94, %v632, 0
    %660 = vmatprep.subr.bf16.mxu0 0
    %661 = vmatpush1.bf16.msra.mxu0 %v650
    %662 = vmatprep.subr.bf16.mxu0 0
    %663 = vmatpush1.bf16.msra.mxu0 %v651
    %664 = vmatprep.subr.bf16.mxu0 0
    %665 = vmatpush1.bf16.msra.mxu0 0
    %666 = vmatprep.subr.bf16.mxu0 0
    %667 = vmatpush1.bf16.msra.mxu0 0
    %668 = vmatprep.subr.bf16.mxu0 0
    %669 = vmatpush1.bf16.msra.mxu0 0
    %670 = vmatprep.subr.bf16.mxu0 0
    %671 = vmatpush1.bf16.msra.mxu0 0
    %672 = vmatprep.subr.bf16.mxu0 0
    %673 = vmatpush1.bf16.msra.mxu0 0
    %674 = vmatprep.subr.bf16.mxu0 0
    %675 = vmatpush1.bf16.msra.mxu0 0
    %676 = vmatprep.subr.bf16.mxu0 0
    %677 = vmatpush1.bf16.msra.mxu0 0
    %678 = vmatprep.subr.bf16.mxu0 0
    %679 = vmatpush1.bf16.msra.mxu0 0
    %680 = vmatprep.subr.bf16.mxu0 0
    %681 = vmatpush1.bf16.msra.mxu0 0
    %682 = vmatprep.subr.bf16.mxu0 0
    %683 = vmatpush1.bf16.msra.mxu0 0
    %684 = vmatprep.subr.bf16.mxu0 0
    %685 = vmatpush1.bf16.msra.mxu0 0
    %686 = vmatprep.subr.bf16.mxu0 0
    %687 = vmatpush1.bf16.msra.mxu0 0
    %688 = vmatprep.subr.bf16.mxu0 0
    %689 = vmatpush1.bf16.msra.mxu0 0
    %690 = vmatprep.subr.bf16.mxu0 0
    %691 = vmatpush1.bf16.msra.mxu0 0
    %692 = vmatprep.mubr.bf16.mxu0 0
    %693 = vmatmul.mubr.bf16.gmra.mrb[0].mxu0 %v655
    %v694 = vpop.f32.mrb[0].mxu0
    %v695 = vadd.f32 %v641, %v694
    %v696 = vpop.f32.mrb[0].mxu0
    %v697 = vpop.f32.mrb[0].mxu0
    %v698 = vadd.f32 %v641, %v697
    %v699 = vpop.f32.mrb[0].mxu0
    %700 = vmatprep.mubr.bf16.mxu0 0
    %701 = vmatmul.mubr.bf16.gmra.mrb[0].mxu0 %v658
    %v702 = vpop.f32.mrb[0].mxu0
    %v703 = vadd.f32 %v641, %v702
    %v704 = vpop.f32.mrb[0].mxu0
    %v705 = vpop.f32.mrb[0].mxu0
    %v706 = vadd.f32 %v641, %v705
    %v707 = vpop.f32.mrb[0].mxu0
    %708 = vdwg.mxu0
    %v709 = vld [vmem:[#allocation11 + $0x2] sm:$0x1]
    %v710 = vld [vmem:[#allocation11 + $0x3] sm:$0x1]
    %v711 = vadd.f32 %v160, %v695
    %v712 = vadd.f32 %v161, %v698
    %v713 = vadd.f32 %v162, %v703
    %v714 = vadd.f32 %v163, %v706
    %v715 = vsel %vm94, %v711, 0.0
    %716 = vadd.xlane.f32.xlu0 %v715
    %v717 = vpop.xlane.xlu0 %716
    %v718 = vsel %vm94, %v712, 0.0
    %719 = vadd.xlane.f32.xlu0 %v718
    %v720 = vpop.xlane.xlu0 %719
    %v721 = vsel %vm94, %v713, 0.0
    %722 = vadd.xlane.f32.xlu0 %v721
    %v723 = vpop.xlane.xlu0 %722
    %v724 = vsel %vm94, %v714, 0.0
    %725 = vadd.xlane.f32.xlu0 %v724
    %v726 = vpop.xlane.xlu0 %725
    %v727 = vmul.f32 %v717, %v107
    %v728 = vmul.f32 %v720, %v107
    %v729 = vmul.f32 %v723, %v107
    %v730 = vmul.f32 %v726, %v107
    %v731 = vsub.f32 %v711, %v727
    %v732 = vsub.f32 %v712, %v728
    %v733 = vsub.f32 %v713, %v729
    %v734 = vsub.f32 %v714, %v730
    %v735 = vmul.f32 %v731, %v731
    %v736 = vmul.f32 %v732, %v732
    %v737 = vmul.f32 %v733, %v733
    %v738 = vmul.f32 %v734, %v734
    %v739 = vsel %vm94, %v735, 0.0
    %740 = vadd.xlane.f32.xlu0 %v739
    %v741 = vpop.xlane.xlu0 %740
    %v742 = vsel %vm94, %v736, 0.0
    %743 = vadd.xlane.f32.xlu0 %v742
    %v744 = vpop.xlane.xlu0 %743
    %v745 = vsel %vm94, %v737, 0.0
    %746 = vadd.xlane.f32.xlu0 %v745
    %v747 = vpop.xlane.xlu0 %746
    %v748 = vsel %vm94, %v738, 0.0
    %749 = vadd.xlane.f32.xlu0 %v748
    %v750 = vpop.xlane.xlu0 %749
    %v751 = vmul.f32 %v741, %v107
    %v752 = vmul.f32 %v744, %v107
    %v753 = vmul.f32 %v747, %v107
    %v754 = vmul.f32 %v750, %v107
    %v755 = vadd.f32 %v751, 1e-12
    %v756 = vadd.f32 %v752, 1e-12
    %v757 = vadd.f32 %v753, 1e-12
    %v758 = vadd.f32 %v754, 1e-12
    %v759 = vrsqrt.pop %v755
    %v760 = vrsqrt.pop %v756
    %v761 = vrsqrt.pop %v757
    %v762 = vrsqrt.pop %v758
    %v763 = vmul.f32 %v731, %v759
    %v764 = vmul.f32 %v732, %v760
    %v765 = vmul.f32 %v733, %v761
    %v766 = vmul.f32 %v734, %v762
    %v767 = vlaneseq
    %v768 = vshrl.u32 %v767, 7
    %v769 = vsub.s32 0, %v768
    %v770 = vrot.slane %v709, %v769
    %v771 = vmul.f32 %v763, %v770
    %v772 = vmul.f32 %v764, %v770
    %v773 = vmul.f32 %v765, %v770
    %v774 = vmul.f32 %v766, %v770
    %v775 = vlaneseq
    %v776 = vshrl.u32 %v775, 7
    %v777 = vsub.s32 0, %v776
    %v778 = vrot.slane %v710, %v777
    %v779 = vadd.f32 %v771, %v778
    %v780 = vadd.f32 %v772, %v778
    %v781 = vadd.f32 %v773, %v778
    %v782 = vadd.f32 %v774, %v778
    %v783 = vpack.c.bf16 %v780, %v779
    %v784 = vpack.c.bf16 %v782, %v781
    %v785 = vld [vmem:[#allocation10 + $0x20] sm:$0xf]
    %v786 = vld [vmem:[#allocation10 + $0x24] sm:$0xf]
    %v787 = vld [vmem:[#allocation10 + $0x28] sm:$0xf]
    %v788 = vld [vmem:[#allocation10 + $0x2c] sm:$0xf]
    %v789 = vld [vmem:[#allocation11 + $0x4] sm:$0x1]
    %v790 = vlaneseq
    %v791 = vshrl.u32 %v790, 7
    %v792 = vsub.s32 0, %v791
    %v793 = vrot.slane %v789, %v792
    %v798 = vunpack.c.l.b16 %v785
    %v799 = vunpack.c.l.b16 %v786
    %v800 = vunpack.c.l.b16 %v787
    %v801 = vunpack.c.l.b16 %v788
    %v802 = vpack.c.b16 %v799, %v798
    %v803 = vpack.c.b16 %v801, %v800
    %v807 = vsel %vm94, %v783, 0
    %v810 = vsel %vm94, %v784, 0
    %812 = vmatprep.subr.bf16.mxu0 0
    %813 = vmatpush1.bf16.msra.mxu0 %v802
    %814 = vmatprep.subr.bf16.mxu0 0
    %815 = vmatpush1.bf16.msra.mxu0 %v803
    %816 = vmatprep.subr.bf16.mxu0 0
    %817 = vmatpush1.bf16.msra.mxu0 0
    %818 = vmatprep.subr.bf16.mxu0 0
    %819 = vmatpush1.bf16.msra.mxu0 0
    %820 = vmatprep.subr.bf16.mxu0 0
    %821 = vmatpush1.bf16.msra.mxu0 0
    %822 = vmatprep.subr.bf16.mxu0 0
    %823 = vmatpush1.bf16.msra.mxu0 0
    %824 = vmatprep.subr.bf16.mxu0 0
    %825 = vmatpush1.bf16.msra.mxu0 0
    %826 = vmatprep.subr.bf16.mxu0 0
    %827 = vmatpush1.bf16.msra.mxu0 0
    %828 = vmatprep.subr.bf16.mxu0 0
    %829 = vmatpush1.bf16.msra.mxu0 0
    %830 = vmatprep.subr.bf16.mxu0 0
    %831 = vmatpush1.bf16.msra.mxu0 0
    %832 = vmatprep.subr.bf16.mxu0 0
    %833 = vmatpush1.bf16.msra.mxu0 0
    %834 = vmatprep.subr.bf16.mxu0 0
    %835 = vmatpush1.bf16.msra.mxu0 0
    %836 = vmatprep.subr.bf16.mxu0 0
    %837 = vmatpush1.bf16.msra.mxu0 0
    %838 = vmatprep.subr.bf16.mxu0 0
    %839 = vmatpush1.bf16.msra.mxu0 0
    %840 = vmatprep.subr.bf16.mxu0 0
    %841 = vmatpush1.bf16.msra.mxu0 0
    %842 = vmatprep.subr.bf16.mxu0 0
    %843 = vmatpush1.bf16.msra.mxu0 0
    %844 = vmatprep.mubr.bf16.mxu0 0
    %845 = vmatmul.mubr.bf16.gmra.mrb[0].mxu0 %v807
    %v846 = vpop.f32.mrb[0].mxu0
    %v847 = vadd.f32 %v793, %v846
    %v848 = vpop.f32.mrb[0].mxu0
    %v849 = vpop.f32.mrb[0].mxu0
    %v850 = vadd.f32 %v793, %v849
    %v851 = vpop.f32.mrb[0].mxu0
    %852 = vmatprep.mubr.bf16.mxu0 0
    %853 = vmatmul.mubr.bf16.gmra.mrb[0].mxu0 %v810
    %v854 = vpop.f32.mrb[0].mxu0
    %v855 = vadd.f32 %v793, %v854
    %v856 = vpop.f32.mrb[0].mxu0
    %v857 = vpop.f32.mrb[0].mxu0
    %v858 = vadd.f32 %v793, %v857
    %v859 = vpop.f32.mrb[0].mxu0
    %860 = vdwg.mxu0
    %v861 = vmul.f32 %v847, %v847
    %v862 = vmul.f32 %v850, %v850
    %v863 = vmul.f32 %v855, %v855
    %v864 = vmul.f32 %v858, %v858
    %v865 = vmul.f32 %v847, %v861
    %v866 = vmul.f32 %v850, %v862
    %v867 = vmul.f32 %v855, %v863
    %v868 = vmul.f32 %v858, %v864
    %v869 = vmul.f32 %v865, 0.044715
    %v870 = vmul.f32 %v866, 0.044715
    %v871 = vmul.f32 %v867, 0.044715
    %v872 = vmul.f32 %v868, 0.044715
    %v873 = vadd.f32 %v847, %v869
    %v874 = vadd.f32 %v850, %v870
    %v875 = vadd.f32 %v855, %v871
    %v876 = vadd.f32 %v858, %v872
    %v877 = vmul.f32 %v873, 0.7978846
    %v878 = vmul.f32 %v874, 0.7978846
    %v879 = vmul.f32 %v875, 0.7978846
    %v880 = vmul.f32 %v876, 0.7978846
    %v881 = vtanh.pop %v877
    %v882 = vtanh.pop %v878
    %v883 = vtanh.pop %v879
    %v884 = vtanh.pop %v880
    %v885 = vadd.f32 %v881, 1.0
    %v886 = vadd.f32 %v882, 1.0
    %v887 = vadd.f32 %v883, 1.0
    %v888 = vadd.f32 %v884, 1.0
    %v889 = vmul.f32 %v885, 0.5
    %v890 = vmul.f32 %v886, 0.5
    %v891 = vmul.f32 %v887, 0.5
    %v892 = vmul.f32 %v888, 0.5
    %v893 = vmul.f32 %v847, %v889
    %v894 = vmul.f32 %v850, %v890
    %v895 = vmul.f32 %v855, %v891
    %v896 = vmul.f32 %v858, %v892
    %v897 = vld [vmem:[#allocation10 + $0x30] sm:$0xf]
    %v898 = vld [vmem:[#allocation10 + $0x34] sm:$0xf]
    %v899 = vld [vmem:[#allocation10 + $0x38] sm:$0xf]
    %v900 = vld [vmem:[#allocation10 + $0x3c] sm:$0xf]
    %v901 = vld [vmem:[#allocation10 + $0x40] sm:$0xf]
    %v902 = vld [vmem:[#allocation10 + $0x44] sm:$0xf]
    %v903 = vld [vmem:[#allocation10 + $0x48] sm:$0xf]
    %v904 = vld [vmem:[#allocation10 + $0x4c] sm:$0xf]
    %v905 = vld [vmem:[#allocation11 + $0x5] sm:$0x1]
    %v906 = vpack.c.bf16 %v894, %v893
    %v907 = vpack.c.bf16 %v896, %v895
    %v908 = vlaneseq
    %v909 = vshrl.u32 %v908, 7
    %v910 = vsub.s32 0, %v909
    %v911 = vrot.slane %v905, %v910
    %v920 = vunpack.c.l.b16 %v897
    %v921 = vunpack.c.l.b16 %v898
    %v922 = vunpack.c.l.b16 %v899
    %v923 = vunpack.c.l.b16 %v900
    %v924 = vunpack.c.l.b16 %v901
    %v925 = vunpack.c.l.b16 %v902
    %v926 = vunpack.c.l.b16 %v903
    %v927 = vunpack.c.l.b16 %v904
    %v928 = vpack.c.b16 %v921, %v920
    %v929 = vpack.c.b16 %v923, %v922
    %v930 = vpack.c.b16 %v925, %v924
    %v931 = vpack.c.b16 %v927, %v926
    %vm936 = vcmask 523264
    %v938 = vsel %vm936, %v906, 0
    %v941 = vsel %vm936, %v907, 0
    %943 = vmatprep.subr.bf16.mxu0 0
    %944 = vmatpush1.bf16.msra.mxu0 %v928
    %945 = vmatprep.subr.bf16.mxu0 0
    %946 = vmatpush1.bf16.msra.mxu0 %v929
    %947 = vmatprep.subr.bf16.mxu0 0
    %948 = vmatpush1.bf16.msra.mxu0 %v930
    %949 = vmatprep.subr.bf16.mxu0 0
    %950 = vmatpush1.bf16.msra.mxu0 %v931
    %951 = vmatprep.subr.bf16.mxu0 0
    %952 = vmatpush1.bf16.msra.mxu0 0
    %953 = vmatprep.subr.bf16.mxu0 0
    %954 = vmatpush1.bf16.msra.mxu0 0
    %955 = vmatprep.subr.bf16.mxu0 0
    %956 = vmatpush1.bf16.msra.mxu0 0
    %957 = vmatprep.subr.bf16.mxu0 0
    %958 = vmatpush1.bf16.msra.mxu0 0
    %959 = vmatprep.subr.bf16.mxu0 0
    %960 = vmatpush1.bf16.msra.mxu0 0
    %961 = vmatprep.subr.bf16.mxu0 0
    %962 = vmatpush1.bf16.msra.mxu0 0
    %963 = vmatprep.subr.bf16.mxu0 0
    %964 = vmatpush1.bf16.msra.mxu0 0
    %965 = vmatprep.subr.bf16.mxu0 0
    %966 = vmatpush1.bf16.msra.mxu0 0
    %967 = vmatprep.subr.bf16.mxu0 0
    %968 = vmatpush1.bf16.msra.mxu0 0
    %969 = vmatprep.subr.bf16.mxu0 0
    %970 = vmatpush1.bf16.msra.mxu0 0
    %971 = vmatprep.subr.bf16.mxu0 0
    %972 = vmatpush1.bf16.msra.mxu0 0
    %973 = vmatprep.subr.bf16.mxu0 0
    %974 = vmatpush1.bf16.msra.mxu0 0
    %975 = vmatprep.mubr.bf16.mxu0 0
    %976 = vmatmul.mubr.bf16.gmra.mrb[0].mxu0 %v938
    %v977 = vpop.f32.mrb[0].mxu0
    %v978 = vadd.f32 %v911, %v977
    %v979 = vpop.f32.mrb[0].mxu0
    %v980 = vpop.f32.mrb[0].mxu0
    %v981 = vadd.f32 %v911, %v980
    %v982 = vpop.f32.mrb[0].mxu0
    %983 = vmatprep.mubr.bf16.mxu0 0
    %984 = vmatmul.mubr.bf16.gmra.mrb[0].mxu0 %v941
    %v985 = vpop.f32.mrb[0].mxu0
    %v986 = vadd.f32 %v911, %v985
    %v987 = vpop.f32.mrb[0].mxu0
    %v988 = vpop.f32.mrb[0].mxu0
    %v989 = vadd.f32 %v911, %v988
    %v990 = vpop.f32.mrb[0].mxu0
    %991 = vdwg.mxu0
    %v992 = vld [vmem:[#allocation11 + $0x6] sm:$0x1]
    %v993 = vld [vmem:[#allocation11 + $0x7] sm:$0x1]
    %v994 = vadd.f32 %v779, %v978
    %v995 = vadd.f32 %v780, %v981
    %v996 = vadd.f32 %v781, %v986
    %v997 = vadd.f32 %v782, %v989
    %v998 = vsel %vm94, %v994, 0.0
    %999 = vadd.xlane.f32.xlu0 %v998
    %v1000 = vpop.xlane.xlu0 %999
    %v1001 = vsel %vm94, %v995, 0.0
    %1002 = vadd.xlane.f32.xlu0 %v1001
    %v1003 = vpop.xlane.xlu0 %1002
    %v1004 = vsel %vm94, %v996, 0.0
    %1005 = vadd.xlane.f32.xlu0 %v1004
    %v1006 = vpop.xlane.xlu0 %1005
    %v1007 = vsel %vm94, %v997, 0.0
    %1008 = vadd.xlane.f32.xlu0 %v1007
    %v1009 = vpop.xlane.xlu0 %1008
    %v1010 = vmul.f32 %v1000, %v107
    %v1011 = vmul.f32 %v1003, %v107
    %v1012 = vmul.f32 %v1006, %v107
    %v1013 = vmul.f32 %v1009, %v107
    %v1014 = vsub.f32 %v994, %v1010
    %v1015 = vsub.f32 %v995, %v1011
    %v1016 = vsub.f32 %v996, %v1012
    %v1017 = vsub.f32 %v997, %v1013
    %v1018 = vmul.f32 %v1014, %v1014
    %v1019 = vmul.f32 %v1015, %v1015
    %v1020 = vmul.f32 %v1016, %v1016
    %v1021 = vmul.f32 %v1017, %v1017
    %v1022 = vsel %vm94, %v1018, 0.0
    %1023 = vadd.xlane.f32.xlu0 %v1022
    %v1024 = vpop.xlane.xlu0 %1023
    %v1025 = vsel %vm94, %v1019, 0.0
    %1026 = vadd.xlane.f32.xlu0 %v1025
    %v1027 = vpop.xlane.xlu0 %1026
    %v1028 = vsel %vm94, %v1020, 0.0
    %1029 = vadd.xlane.f32.xlu0 %v1028
    %v1030 = vpop.xlane.xlu0 %1029
    %v1031 = vsel %vm94, %v1021, 0.0
    %1032 = vadd.xlane.f32.xlu0 %v1031
    %v1033 = vpop.xlane.xlu0 %1032
    %v1034 = vmul.f32 %v1024, %v107
    %v1035 = vmul.f32 %v1027, %v107
    %v1036 = vmul.f32 %v1030, %v107
    %v1037 = vmul.f32 %v1033, %v107
    %v1038 = vadd.f32 %v1034, 1e-12
    %v1039 = vadd.f32 %v1035, 1e-12
    %v1040 = vadd.f32 %v1036, 1e-12
    %v1041 = vadd.f32 %v1037, 1e-12
    %v1042 = vrsqrt.pop %v1038
    %v1043 = vrsqrt.pop %v1039
    %v1044 = vrsqrt.pop %v1040
    %v1045 = vrsqrt.pop %v1041
    %v1046 = vmul.f32 %v1014, %v1042
    %v1047 = vmul.f32 %v1015, %v1043
    %v1048 = vmul.f32 %v1016, %v1044
    %v1049 = vmul.f32 %v1017, %v1045
    %v1050 = vlaneseq
    %v1051 = vshrl.u32 %v1050, 7
    %v1052 = vsub.s32 0, %v1051
    %v1053 = vrot.slane %v992, %v1052
    %v1054 = vmul.f32 %v1046, %v1053
    %v1055 = vmul.f32 %v1047, %v1053
    %v1056 = vmul.f32 %v1048, %v1053
    %v1057 = vmul.f32 %v1049, %v1053
    %v1058 = vlaneseq
    %v1059 = vshrl.u32 %v1058, 7
    %v1060 = vsub.s32 0, %v1059
    %v1061 = vrot.slane %v993, %v1060
    %v1062 = vadd.f32 %v1054, %v1061
    %v1063 = vadd.f32 %v1055, %v1061
    %v1064 = vadd.f32 %v1056, %v1061
    %v1065 = vadd.f32 %v1057, %v1061
    %v1066 = vpack.c.bf16 %v1063, %v1062
    %v1067 = vpack.c.bf16 %v1065, %v1064
    %v1068 = vld [vmem:[#allocation10 + $0x50] sm:$0xf]
    %v1069 = vld [vmem:[#allocation10 + $0x54] sm:$0xf]
    %v1070 = vld [vmem:[#allocation10 + $0x58] sm:$0xf]
    %v1071 = vld [vmem:[#allocation10 + $0x5c] sm:$0xf]
    %v1072 = vld [vmem:[#allocation11 + $0x8] sm:$0x1]
    %v1073 = vlaneseq
    %v1074 = vshrl.u32 %v1073, 7
    %v1075 = vsub.s32 0, %v1074
    %v1076 = vrot.slane %v1072, %v1075
    %v1081 = vunpack.c.l.b16 %v1068
    %v1082 = vunpack.c.l.b16 %v1069
    %v1083 = vunpack.c.l.b16 %v1070
    %v1084 = vunpack.c.l.b16 %v1071
    %v1085 = vpack.c.b16 %v1082, %v1081
    %v1086 = vpack.c.b16 %v1084, %v1083
    %v1090 = vsel %vm94, %v1066, 0
    %v1093 = vsel %vm94, %v1067, 0
    %1095 = vmatprep.subr.bf16.mxu0 0
    %1096 = vmatpush1.bf16.msra.mxu0 %v1085
    %1097 = vmatprep.subr.bf16.mxu0 0
    %1098 = vmatpush1.bf16.msra.mxu0 %v1086
    %1099 = vmatprep.subr.bf16.mxu0 0
    %1100 = vmatpush1.bf16.msra.mxu0 0
    %1101 = vmatprep.subr.bf16.mxu0 0
    %1102 = vmatpush1.bf16.msra.mxu0 0
    %1103 = vmatprep.subr.bf16.mxu0 0
    %1104 = vmatpush1.bf16.msra.mxu0 0
    %1105 = vmatprep.subr.bf16.mxu0 0
    %1106 = vmatpush1.bf16.msra.mxu0 0
    %1107 = vmatprep.subr.bf16.mxu0 0
    %1108 = vmatpush1.bf16.msra.mxu0 0
    %1109 = vmatprep.subr.bf16.mxu0 0
    %1110 = vmatpush1.bf16.msra.mxu0 0
    %1111 = vmatprep.subr.bf16.mxu0 0
    %1112 = vmatpush1.bf16.msra.mxu0 0
    %1113 = vmatprep.subr.bf16.mxu0 0
    %1114 = vmatpush1.bf16.msra.mxu0 0
    %1115 = vmatprep.subr.bf16.mxu0 0
    %1116 = vmatpush1.bf16.msra.mxu0 0
    %1117 = vmatprep.subr.bf16.mxu0 0
    %1118 = vmatpush1.bf16.msra.mxu0 0
    %1119 = vmatprep.subr.bf16.mxu0 0
    %1120 = vmatpush1.bf16.msra.mxu0 0
    %1121 = vmatprep.subr.bf16.mxu0 0
    %1122 = vmatpush1.bf16.msra.mxu0 0
    %1123 = vmatprep.subr.bf16.mxu0 0
    %1124 = vmatpush1.bf16.msra.mxu0 0
    %1125 = vmatprep.subr.bf16.mxu0 0
    %1126 = vmatpush1.bf16.msra.mxu0 0
    %1127 = vmatprep.mubr.bf16.mxu0 0
    %1128 = vmatmul.mubr.bf16.gmra.mrb[0].mxu0 %v1090
    %v1129 = vpop.f32.mrb[0].mxu0
    %v1130 = vadd.f32 %v1076, %v1129
    %v1131 = vpop.f32.mrb[0].mxu0
    %v1132 = vpop.f32.mrb[0].mxu0
    %v1133 = vadd.f32 %v1076, %v1132
    %v1134 = vpop.f32.mrb[0].mxu0
    %1135 = vmatprep.mubr.bf16.mxu0 0
    %1136 = vmatmul.mubr.bf16.gmra.mrb[0].mxu0 %v1093
    %v1137 = vpop.f32.mrb[0].mxu0
    %v1138 = vadd.f32 %v1076, %v1137
    %v1139 = vpop.f32.mrb[0].mxu0
    %v1140 = vpop.f32.mrb[0].mxu0
    %v1141 = vadd.f32 %v1076, %v1140
    %v1142 = vpop.f32.mrb[0].mxu0
    %1143 = vdwg.mxu0
    %v1144 = vpack.c.bf16 %v1133, %v1130
    %v1145 = vpack.c.bf16 %v1141, %v1138
    %1148 = vrot.lane.b32.xlu0 %v1144, 96
    %v1149 = vpop.permute.xlu0 %1148
    %1150 = vrot.lane.b32.xlu0 %v1145, 96
    %v1151 = vpop.permute.xlu0 %1150
    %v1153 = vsel %vm250, %v1144, 0
    %v1156 = vsel %vm250, %v1145, 0
    %v1159 = vsel %vm250, %v1149, 0
    %v1162 = vsel %vm250, %v1151, 0
    %1164 = vmatprep.subr.bf16.mxu0 0
    %1165 = vmatpush1.bf16.xpose.msra.mxu0 %v1159
    %1166 = vmatprep.subr.bf16.mxu0 0
    %1167 = vmatpush1.bf16.xpose.msra.mxu0 %v1162
    %1168 = vmatprep.subr.bf16.mxu0 0
    %1169 = vmatpush1.bf16.xpose.msra.mxu0 0
    %1170 = vmatprep.subr.bf16.mxu0 0
    %1171 = vmatpush1.bf16.xpose.msra.mxu0 0
    %1172 = vmatprep.subr.bf16.mxu0 0
    %1173 = vmatpush1.bf16.xpose.msra.mxu0 0
    %1174 = vmatprep.subr.bf16.mxu0 0
    %1175 = vmatpush1.bf16.xpose.msra.mxu0 0
    %1176 = vmatprep.subr.bf16.mxu0 0
    %1177 = vmatpush1.bf16.xpose.msra.mxu0 0
    %1178 = vmatprep.subr.bf16.mxu0 0
    %1179 = vmatpush1.bf16.xpose.msra.mxu0 0
    %1180 = vmatprep.subr.bf16.mxu0 0
    %1181 = vmatpush1.bf16.xpose.msra.mxu0 0
    %1182 = vmatprep.subr.bf16.mxu0 0
    %1183 = vmatpush1.bf16.xpose.msra.mxu0 0
    %1184 = vmatprep.subr.bf16.mxu0 0
    %1185 = vmatpush1.bf16.xpose.msra.mxu0 0
    %1186 = vmatprep.subr.bf16.mxu0 0
    %1187 = vmatpush1.bf16.xpose.msra.mxu0 0
    %1188 = vmatprep.subr.bf16.mxu0 0
    %1189 = vmatpush1.bf16.xpose.msra.mxu0 0
    %1190 = vmatprep.subr.bf16.mxu0 0
    %1191 = vmatpush1.bf16.xpose.msra.mxu0 0
    %1192 = vmatprep.subr.bf16.mxu0 0
    %1193 = vmatpush1.bf16.xpose.msra.mxu0 0
    %1194 = vmatprep.subr.bf16.mxu0 0
    %1195 = vmatpush1.bf16.xpose.msra.mxu0 0
    %1196 = vmatprep.mubr.bf16.mxu0 0
    %1197 = vmatmul.mubr.bf16.gmra.mrb[0].mxu0 %v1153
    %v1198 = vpop.f32.mrb[0].mxu0
    %v1199 = vadd.f32 0.0, %v1198
    %v1200 = vpop.f32.mrb[0].mxu0
    %v1201 = vpop.f32.mrb[0].mxu0
    %v1202 = vadd.f32 0.0, %v1201
    %v1203 = vpop.f32.mrb[0].mxu0
    %1204 = vmatprep.mubr.bf16.mxu0 0
    %1205 = vmatmul.mubr.bf16.gmra.mrb[0].mxu0 %v1156
    %v1206 = vpop.f32.mrb[0].mxu0
    %v1207 = vadd.f32 0.0, %v1206
    %v1208 = vpop.f32.mrb[0].mxu0
    %v1209 = vpop.f32.mrb[0].mxu0
    %v1210 = vadd.f32 0.0, %v1209
    %v1211 = vpop.f32.mrb[0].mxu0
    %1212 = vdwg.mxu0
    %v1213 = vmul.f32 %v1199, 0.25
    %v1214 = vmul.f32 %v1202, 0.25
    %v1215 = vmul.f32 %v1207, 0.25
    %v1216 = vmul.f32 %v1210, 0.25
    %v1217 = vadd.f32 %v1213, %v84
    %v1218 = vadd.f32 %v1214, %v85
    %v1219 = vadd.f32 %v1215, %v86
    %v1220 = vadd.f32 %v1216, %v87
    %v1221 = vsel %vm94, %v1217, -inf
    %1222 = vmax.xlane.f32.xlu0 %v1221
    %v1223 = vpop.xlane.xlu0 %1222
    %v1224 = vsel %vm94, %v1218, -inf
    %1225 = vmax.xlane.f32.xlu0 %v1224
    %v1226 = vpop.xlane.xlu0 %1225
    %v1227 = vsel %vm94, %v1219, -inf
    %1228 = vmax.xlane.f32.xlu0 %v1227
    %v1229 = vpop.xlane.xlu0 %1228
    %v1230 = vsel %vm94, %v1220, -inf
    %1231 = vmax.xlane.f32.xlu0 %v1230
    %v1232 = vpop.xlane.xlu0 %1231
    %v1233 = vsub.f32 %v1217, %v1223
    %v1234 = vsub.f32 %v1218, %v1226
    %v1235 = vsub.f32 %v1219, %v1229
    %v1236 = vsub.f32 %v1220, %v1232
    %v1237 = vmul.f32 %v1233, 1.442695
    %v1238 = vpow.pop %v1237
    %v1239 = vmul.f32 %v1234, 1.442695
    %v1240 = vpow.pop %v1239
    %v1241 = vmul.f32 %v1235, 1.442695
    %v1242 = vpow.pop %v1241
    %v1243 = vmul.f32 %v1236, 1.442695
    %v1244 = vpow.pop %v1243
    %v1245 = vsel %vm94, %v1238, 0.0
    %1246 = vadd.xlane.f32.xlu0 %v1245
    %v1247 = vpop.xlane.xlu0 %1246
    %v1248 = vsel %vm94, %v1240, 0.0
    %1249 = vadd.xlane.f32.xlu0 %v1248
    %v1250 = vpop.xlane.xlu0 %1249
    %v1251 = vsel %vm94, %v1242, 0.0
    %1252 = vadd.xlane.f32.xlu0 %v1251
    %v1253 = vpop.xlane.xlu0 %1252
    %v1254 = vsel %vm94, %v1244, 0.0
    %1255 = vadd.xlane.f32.xlu0 %v1254
    %v1256 = vpop.xlane.xlu0 %1255
    %v1257 = vrcp.pop %v1247
    %v1258 = vrcp.pop %v1250
    %v1259 = vrcp.pop %v1253
    %v1260 = vrcp.pop %v1256
    %v1261 = vmul.f32 %v1238, %v1257
    %v1262 = vmul.f32 %v1240, %v1258
    %v1263 = vmul.f32 %v1242, %v1259
    %v1264 = vmul.f32 %v1244, %v1260
    %v1265 = vpack.c.bf16 %v1262, %v1261
    %v1266 = vpack.c.bf16 %v1264, %v1263
    %1267 = vrot.lane.b32.xlu0 %v1144, 64
    %v1268 = vpop.permute.xlu0 %1267
    %1269 = vrot.lane.b32.xlu0 %v1145, 64
    %v1270 = vpop.permute.xlu0 %1269
    %v1274 = vsel %vm94, %v1265, 0
    %v1277 = vsel %vm94, %v1266, 0
    %1279 = vmatprep.subr.bf16.mxu0 0
    %1280 = vmatpush1.bf16.msra.mxu0 %v1268
    %1281 = vmatprep.subr.bf16.mxu0 0
    %1282 = vmatpush1.bf16.msra.mxu0 %v1270
    %1283 = vmatprep.subr.bf16.mxu0 0
    %1284 = vmatpush1.bf16.msra.mxu0 0
    %1285 = vmatprep.subr.bf16.mxu0 0
    %1286 = vmatpush1.bf16.msra.mxu0 0
    %1287 = vmatprep.subr.bf16.mxu0 0
    %1288 = vmatpush1.bf16.msra.mxu0 0
    %1289 = vmatprep.subr.bf16.mxu0 0
    %1290 = vmatpush1.bf16.msra.mxu0 0
    %1291 = vmatprep.subr.bf16.mxu0 0
    %1292 = vmatpush1.bf16.msra.mxu0 0
    %1293 = vmatprep.subr.bf16.mxu0 0
    %1294 = vmatpush1.bf16.msra.mxu0 0
    %1295 = vmatprep.subr.bf16.mxu0 0
    %1296 = vmatpush1.bf16.msra.mxu0 0
    %1297 = vmatprep.subr.bf16.mxu0 0
    %1298 = vmatpush1.bf16.msra.mxu0 0
    %1299 = vmatprep.subr.bf16.mxu0 0
    %1300 = vmatpush1.bf16.msra.mxu0 0
    %1301 = vmatprep.subr.bf16.mxu0 0
    %1302 = vmatpush1.bf16.msra.mxu0 0
    %1303 = vmatprep.subr.bf16.mxu0 0
    %1304 = vmatpush1.bf16.msra.mxu0 0
    %1305 = vmatprep.subr.bf16.mxu0 0
    %1306 = vmatpush1.bf16.msra.mxu0 0
    %1307 = vmatprep.subr.bf16.mxu0 0
    %1308 = vmatpush1.bf16.msra.mxu0 0
    %1309 = vmatprep.subr.bf16.mxu0 0
    %1310 = vmatpush1.bf16.msra.mxu0 0
    %1311 = vmatprep.mubr.bf16.mxu0 0
    %1312 = vmatmul.mubr.bf16.gmra.mrb[0].mxu0 %v1274
    %v1313 = vpop.f32.mrb[0].mxu0
    %v1314 = vadd.f32 0.0, %v1313
    %v1315 = vpop.f32.mrb[0].mxu0
    %v1316 = vpop.f32.mrb[0].mxu0
    %v1317 = vadd.f32 0.0, %v1316
    %v1318 = vpop.f32.mrb[0].mxu0
    %1319 = vmatprep.mubr.bf16.mxu0 0
    %1320 = vmatmul.mubr.bf16.gmra.mrb[0].mxu0 %v1277
    %v1321 = vpop.f32.mrb[0].mxu0
    %v1322 = vadd.f32 0.0, %v1321
    %v1323 = vpop.f32.mrb[0].mxu0
    %v1324 = vpop.f32.mrb[0].mxu0
    %v1325 = vadd.f32 0.0, %v1324
    %v1326 = vpop.f32.mrb[0].mxu0
    %1327 = vdwg.mxu0
    %1328 = vrot.lane.b32.xlu0 %v1144, 112
    %v1329 = vpop.permute.xlu0 %1328
    %1330 = vrot.lane.b32.xlu0 %v1145, 112
    %v1331 = vpop.permute.xlu0 %1330
    %1332 = vrot.lane.b32.xlu0 %v1144, 80
    %v1333 = vpop.permute.xlu0 %1332
    %1334 = vrot.lane.b32.xlu0 %v1145, 80
    %v1335 = vpop.permute.xlu0 %1334
    %v1337 = vsel %vm250, %v1329, 0
    %v1340 = vsel %vm250, %v1331, 0
    %v1343 = vsel %vm250, %v1333, 0
    %v1346 = vsel %vm250, %v1335, 0
    %1348 = vmatprep.subr.bf16.mxu0 0
    %1349 = vmatpush1.bf16.xpose.msra.mxu0 %v1343
    %1350 = vmatprep.subr.bf16.mxu0 0
    %1351 = vmatpush1.bf16.xpose.msra.mxu0 %v1346
    %1352 = vmatprep.subr.bf16.mxu0 0
    %1353 = vmatpush1.bf16.xpose.msra.mxu0 0
    %1354 = vmatprep.subr.bf16.mxu0 0
    %1355 = vmatpush1.bf16.xpose.msra.mxu0 0
    %1356 = vmatprep.subr.bf16.mxu0 0
    %1357 = vmatpush1.bf16.xpose.msra.mxu0 0
    %1358 = vmatprep.subr.bf16.mxu0 0
    %1359 = vmatpush1.bf16.xpose.msra.mxu0 0
    %1360 = vmatprep.subr.bf16.mxu0 0
    %1361 = vmatpush1.bf16.xpose.msra.mxu0 0
    %1362 = vmatprep.subr.bf16.mxu0 0
    %1363 = vmatpush1.bf16.xpose.msra.mxu0 0
    %1364 = vmatprep.subr.bf16.mxu0 0
    %1365 = vmatpush1.bf16.xpose.msra.mxu0 0
    %1366 = vmatprep.subr.bf16.mxu0 0
    %1367 = vmatpush1.bf16.xpose.msra.mxu0 0
    %1368 = vmatprep.subr.bf16.mxu0 0
    %1369 = vmatpush1.bf16.xpose.msra.mxu0 0
    %1370 = vmatprep.subr.bf16.mxu0 0
    %1371 = vmatpush1.bf16.xpose.msra.mxu0 0
    %1372 = vmatprep.subr.bf16.mxu0 0
    %1373 = vmatpush1.bf16.xpose.msra.mxu0 0
    %1374 = vmatprep.subr.bf16.mxu0 0
    %1375 = vmatpush1.bf16.xpose.msra.mxu0 0
    %1376 = vmatprep.subr.bf16.mxu0 0
    %1377 = vmatpush1.bf16.xpose.msra.mxu0 0
    %1378 = vmatprep.subr.bf16.mxu0 0
    %1379 = vmatpush1.bf16.xpose.msra.mxu0 0
    %1380 = vmatprep.mubr.bf16.mxu0 0
    %1381 = vmatmul.mubr.bf16.gmra.mrb[0].mxu0 %v1337
    %v1382 = vpop.f32.mrb[0].mxu0
    %v1383 = vadd.f32 0.0, %v1382
    %v1384 = vpop.f32.mrb[0].mxu0
    %v1385 = vpop.f32.mrb[0].mxu0
    %v1386 = vadd.f32 0.0, %v1385
    %v1387 = vpop.f32.mrb[0].mxu0
    %1388 = vmatprep.mubr.bf16.mxu0 0
    %1389 = vmatmul.mubr.bf16.gmra.mrb[0].mxu0 %v1340
    %v1390 = vpop.f32.mrb[0].mxu0
    %v1391 = vadd.f32 0.0, %v1390
    %v1392 = vpop.f32.mrb[0].mxu0
    %v1393 = vpop.f32.mrb[0].mxu0
    %v1394 = vadd.f32 0.0, %v1393
    %v1395 = vpop.f32.mrb[0].mxu0
    %1396 = vdwg.mxu0
    %v1397 = vmul.f32 %v1383, 0.25
    %v1398 = vmul.f32 %v1386, 0.25
    %v1399 = vmul.f32 %v1391, 0.25
    %v1400 = vmul.f32 %v1394, 0.25
    %v1401 = vadd.f32 %v1397, %v84
    %v1402 = vadd.f32 %v1398, %v85
    %v1403 = vadd.f32 %v1399, %v86
    %v1404 = vadd.f32 %v1400, %v87
    %v1405 = vsel %vm94, %v1401, -inf
    %1406 = vmax.xlane.f32.xlu0 %v1405
    %v1407 = vpop.xlane.xlu0 %1406
    %v1408 = vsel %vm94, %v1402, -inf
    %1409 = vmax.xlane.f32.xlu0 %v1408
    %v1410 = vpop.xlane.xlu0 %1409
    %v1411 = vsel %vm94, %v1403, -inf
    %1412 = vmax.xlane.f32.xlu0 %v1411
    %v1413 = vpop.xlane.xlu0 %1412
    %v1414 = vsel %vm94, %v1404, -inf
    %1415 = vmax.xlane.f32.xlu0 %v1414
    %v1416 = vpop.xlane.xlu0 %1415
    %v1417 = vsub.f32 %v1401, %v1407
    %v1418 = vsub.f32 %v1402, %v1410
    %v1419 = vsub.f32 %v1403, %v1413
    %v1420 = vsub.f32 %v1404, %v1416
    %v1421 = vmul.f32 %v1417, 1.442695
    %v1422 = vpow.pop %v1421
    %v1423 = vmul.f32 %v1418, 1.442695
    %v1424 = vpow.pop %v1423
    %v1425 = vmul.f32 %v1419, 1.442695
    %v1426 = vpow.pop %v1425
    %v1427 = vmul.f32 %v1420, 1.442695
    %v1428 = vpow.pop %v1427
    %v1429 = vsel %vm94, %v1422, 0.0
    %1430 = vadd.xlane.f32.xlu0 %v1429
    %v1431 = vpop.xlane.xlu0 %1430
    %v1432 = vsel %vm94, %v1424, 0.0
    %1433 = vadd.xlane.f32.xlu0 %v1432
    %v1434 = vpop.xlane.xlu0 %1433
    %v1435 = vsel %vm94, %v1426, 0.0
    %1436 = vadd.xlane.f32.xlu0 %v1435
    %v1437 = vpop.xlane.xlu0 %1436
    %v1438 = vsel %vm94, %v1428, 0.0
    %1439 = vadd.xlane.f32.xlu0 %v1438
    %v1440 = vpop.xlane.xlu0 %1439
    %v1441 = vrcp.pop %v1431
    %v1442 = vrcp.pop %v1434
    %v1443 = vrcp.pop %v1437
    %v1444 = vrcp.pop %v1440
    %v1445 = vmul.f32 %v1422, %v1441
    %v1446 = vmul.f32 %v1424, %v1442
    %v1447 = vmul.f32 %v1426, %v1443
    %v1448 = vmul.f32 %v1428, %v1444
    %v1449 = vpack.c.bf16 %v1446, %v1445
    %v1450 = vpack.c.bf16 %v1448, %v1447
    %1451 = vrot.lane.b32.xlu0 %v1144, 48
    %v1452 = vpop.permute.xlu0 %1451
    %1453 = vrot.lane.b32.xlu0 %v1145, 48
    %v1454 = vpop.permute.xlu0 %1453
    %v1458 = vsel %vm94, %v1449, 0
    %v1461 = vsel %vm94, %v1450, 0
    %1463 = vmatprep.subr.bf16.mxu0 0
    %1464 = vmatpush1.bf16.msra.mxu0 %v1452
    %1465 = vmatprep.subr.bf16.mxu0 0
    %1466 = vmatpush1.bf16.msra.mxu0 %v1454
    %1467 = vmatprep.subr.bf16.mxu0 0
    %1468 = vmatpush1.bf16.msra.mxu0 0
    %1469 = vmatprep.subr.bf16.mxu0 0
    %1470 = vmatpush1.bf16.msra.mxu0 0
    %1471 = vmatprep.subr.bf16.mxu0 0
    %1472 = vmatpush1.bf16.msra.mxu0 0
    %1473 = vmatprep.subr.bf16.mxu0 0
    %1474 = vmatpush1.bf16.msra.mxu0 0
    %1475 = vmatprep.subr.bf16.mxu0 0
    %1476 = vmatpush1.bf16.msra.mxu0 0
    %1477 = vmatprep.subr.bf16.mxu0 0
    %1478 = vmatpush1.bf16.msra.mxu0 0
    %1479 = vmatprep.subr.bf16.mxu0 0
    %1480 = vmatpush1.bf16.msra.mxu0 0
    %1481 = vmatprep.subr.bf16.mxu0 0
    %1482 = vmatpush1.bf16.msra.mxu0 0
    %1483 = vmatprep.subr.bf16.mxu0 0
    %1484 = vmatpush1.bf16.msra.mxu0 0
    %1485 = vmatprep.subr.bf16.mxu0 0
    %1486 = vmatpush1.bf16.msra.mxu0 0
    %1487 = vmatprep.subr.bf16.mxu0 0
    %1488 = vmatpush1.bf16.msra.mxu0 0
    %1489 = vmatprep.subr.bf16.mxu0 0
    %1490 = vmatpush1.bf16.msra.mxu0 0
    %1491 = vmatprep.subr.bf16.mxu0 0
    %1492 = vmatpush1.bf16.msra.mxu0 0
    %1493 = vmatprep.subr.bf16.mxu0 0
    %1494 = vmatpush1.bf16.msra.mxu0 0
    %1495 = vmatprep.mubr.bf16.mxu0 0
    %1496 = vmatmul.mubr.bf16.gmra.mrb[0].mxu0 %v1458
    %v1497 = vpop.f32.mrb[0].mxu0
    %v1498 = vadd.f32 0.0, %v1497
    %v1499 = vpop.f32.mrb[0].mxu0
    %v1500 = vpop.f32.mrb[0].mxu0
    %v1501 = vadd.f32 0.0, %v1500
    %v1502 = vpop.f32.mrb[0].mxu0
    %1503 = vmatprep.mubr.bf16.mxu0 0
    %1504 = vmatmul.mubr.bf16.gmra.mrb[0].mxu0 %v1461
    %v1505 = vpop.f32.mrb[0].mxu0
    %v1506 = vadd.f32 0.0, %v1505
    %v1507 = vpop.f32.mrb[0].mxu0
    %v1508 = vpop.f32.mrb[0].mxu0
    %v1509 = vadd.f32 0.0, %v1508
    %v1510 = vpop.f32.mrb[0].mxu0
    %1511 = vdwg.mxu0
    %1516 = vrot.lane.b32.xlu0 %v1498, 16
    %v1517 = vpop.permute.xlu0 %1516
    %1518 = vrot.lane.b32.xlu0 %v1501, 16
    %v1519 = vpop.permute.xlu0 %1518
    %1520 = vrot.lane.b32.xlu0 %v1506, 16
    %v1521 = vpop.permute.xlu0 %1520
    %1522 = vrot.lane.b32.xlu0 %v1509, 16
    %v1523 = vpop.permute.xlu0 %1522
    %v1528 = vsel %vm250, %v1314, %v1517
    %v1529 = vsel %vm250, %v1317, %v1519
    %v1530 = vsel %vm250, %v1322, %v1521
    %v1531 = vsel %vm250, %v1325, %v1523
    %v1532 = vpack.c.bf16 %v1529, %v1528
    %v1533 = vpack.c.bf16 %v1531, %v1530
    %v1534 = vld [vmem:[#allocation10 + $0x60] sm:$0xf]
    %v1535 = vld [vmem:[#allocation10 + $0x64] sm:$0xf]
    %v1536 = vld [vmem:[#allocation10 + $0x68] sm:$0xf]
    %v1537 = vld [vmem:[#allocation10 + $0x6c] sm:$0xf]
    %v1538 = vld [vmem:[#allocation11 + $0x9] sm:$0x1]
    %v1539 = vlaneseq
    %v1540 = vshrl.u32 %v1539, 7
    %v1541 = vsub.s32 0, %v1540
    %v1542 = vrot.slane %v1538, %v1541
    %v1547 = vunpack.c.l.b16 %v1534
    %v1548 = vunpack.c.l.b16 %v1535
    %v1549 = vunpack.c.l.b16 %v1536
    %v1550 = vunpack.c.l.b16 %v1537
    %v1551 = vpack.c.b16 %v1548, %v1547
    %v1552 = vpack.c.b16 %v1550, %v1549
    %v1556 = vsel %vm94, %v1532, 0
    %v1559 = vsel %vm94, %v1533, 0
    %1561 = vmatprep.subr.bf16.mxu0 0
    %1562 = vmatpush1.bf16.msra.mxu0 %v1551
    %1563 = vmatprep.subr.bf16.mxu0 0
    %1564 = vmatpush1.bf16.msra.mxu0 %v1552
    %1565 = vmatprep.subr.bf16.mxu0 0
    %1566 = vmatpush1.bf16.msra.mxu0 0
    %1567 = vmatprep.subr.bf16.mxu0 0
    %1568 = vmatpush1.bf16.msra.mxu0 0
    %1569 = vmatprep.subr.bf16.mxu0 0
    %1570 = vmatpush1.bf16.msra.mxu0 0
    %1571 = vmatprep.subr.bf16.mxu0 0
    %1572 = vmatpush1.bf16.msra.mxu0 0
    %1573 = vmatprep.subr.bf16.mxu0 0
    %1574 = vmatpush1.bf16.msra.mxu0 0
    %1575 = vmatprep.subr.bf16.mxu0 0
    %1576 = vmatpush1.bf16.msra.mxu0 0
    %1577 = vmatprep.subr.bf16.mxu0 0
    %1578 = vmatpush1.bf16.msra.mxu0 0
    %1579 = vmatprep.subr.bf16.mxu0 0
    %1580 = vmatpush1.bf16.msra.mxu0 0
    %1581 = vmatprep.subr.bf16.mxu0 0
    %1582 = vmatpush1.bf16.msra.mxu0 0
    %1583 = vmatprep.subr.bf16.mxu0 0
    %1584 = vmatpush1.bf16.msra.mxu0 0
    %1585 = vmatprep.subr.bf16.mxu0 0
    %1586 = vmatpush1.bf16.msra.mxu0 0
    %1587 = vmatprep.subr.bf16.mxu0 0
    %1588 = vmatpush1.bf16.msra.mxu0 0
    %1589 = vmatprep.subr.bf16.mxu0 0
    %1590 = vmatpush1.bf16.msra.mxu0 0
    %1591 = vmatprep.subr.bf16.mxu0 0
    %1592 = vmatpush1.bf16.msra.mxu0 0
    %1593 = vmatprep.mubr.bf16.mxu0 0
    %1594 = vmatmul.mubr.bf16.gmra.mrb[0].mxu0 %v1556
    %v1595 = vpop.f32.mrb[0].mxu0
    %v1596 = vadd.f32 %v1542, %v1595
    %v1597 = vpop.f32.mrb[0].mxu0
    %v1598 = vpop.f32.mrb[0].mxu0
    %v1599 = vadd.f32 %v1542, %v1598
    %v1600 = vpop.f32.mrb[0].mxu0
    %1601 = vmatprep.mubr.bf16.mxu0 0
    %1602 = vmatmul.mubr.bf16.gmra.mrb[0].mxu0 %v1559
    %v1603 = vpop.f32.mrb[0].mxu0
    %v1604 = vadd.f32 %v1542, %v1603
    %v1605 = vpop.f32.mrb[0].mxu0
    %v1606 = vpop.f32.mrb[0].mxu0
    %v1607 = vadd.f32 %v1542, %v1606
    %v1608 = vpop.f32.mrb[0].mxu0
    %1609 = vdwg.mxu0
    %v1610 = vld [vmem:[#allocation11 + $0xa] sm:$0x1]
    %v1611 = vld [vmem:[#allocation11 + $0xb] sm:$0x1]
    %v1612 = vadd.f32 %v1062, %v1596
    %v1613 = vadd.f32 %v1063, %v1599
    %v1614 = vadd.f32 %v1064, %v1604
    %v1615 = vadd.f32 %v1065, %v1607
    %v1616 = vsel %vm94, %v1612, 0.0
    %1617 = vadd.xlane.f32.xlu0 %v1616
    %v1618 = vpop.xlane.xlu0 %1617
    %v1619 = vsel %vm94, %v1613, 0.0
    %1620 = vadd.xlane.f32.xlu0 %v1619
    %v1621 = vpop.xlane.xlu0 %1620
    %v1622 = vsel %vm94, %v1614, 0.0
    %1623 = vadd.xlane.f32.xlu0 %v1622
    %v1624 = vpop.xlane.xlu0 %1623
    %v1625 = vsel %vm94, %v1615, 0.0
    %1626 = vadd.xlane.f32.xlu0 %v1625
    %v1627 = vpop.xlane.xlu0 %1626
    %v1628 = vmul.f32 %v1618, %v107
    %v1629 = vmul.f32 %v1621, %v107
    %v1630 = vmul.f32 %v1624, %v107
    %v1631 = vmul.f32 %v1627, %v107
    %v1632 = vsub.f32 %v1612, %v1628
    %v1633 = vsub.f32 %v1613, %v1629
    %v1634 = vsub.f32 %v1614, %v1630
    %v1635 = vsub.f32 %v1615, %v1631
    %v1636 = vmul.f32 %v1632, %v1632
    %v1637 = vmul.f32 %v1633, %v1633
    %v1638 = vmul.f32 %v1634, %v1634
    %v1639 = vmul.f32 %v1635, %v1635
    %v1640 = vsel %vm94, %v1636, 0.0
    %1641 = vadd.xlane.f32.xlu0 %v1640
    %v1642 = vpop.xlane.xlu0 %1641
    %v1643 = vsel %vm94, %v1637, 0.0
    %1644 = vadd.xlane.f32.xlu0 %v1643
    %v1645 = vpop.xlane.xlu0 %1644
    %v1646 = vsel %vm94, %v1638, 0.0
    %1647 = vadd.xlane.f32.xlu0 %v1646
    %v1648 = vpop.xlane.xlu0 %1647
    %v1649 = vsel %vm94, %v1639, 0.0
    %1650 = vadd.xlane.f32.xlu0 %v1649
    %v1651 = vpop.xlane.xlu0 %1650
    %v1652 = vmul.f32 %v1642, %v107
    %v1653 = vmul.f32 %v1645, %v107
    %v1654 = vmul.f32 %v1648, %v107
    %v1655 = vmul.f32 %v1651, %v107
    %v1656 = vadd.f32 %v1652, 1e-12
    %v1657 = vadd.f32 %v1653, 1e-12
    %v1658 = vadd.f32 %v1654, 1e-12
    %v1659 = vadd.f32 %v1655, 1e-12
    %v1660 = vrsqrt.pop %v1656
    %v1661 = vrsqrt.pop %v1657
    %v1662 = vrsqrt.pop %v1658
    %v1663 = vrsqrt.pop %v1659
    %v1664 = vmul.f32 %v1632, %v1660
    %v1665 = vmul.f32 %v1633, %v1661
    %v1666 = vmul.f32 %v1634, %v1662
    %v1667 = vmul.f32 %v1635, %v1663
    %v1668 = vlaneseq
    %v1669 = vshrl.u32 %v1668, 7
    %v1670 = vsub.s32 0, %v1669
    %v1671 = vrot.slane %v1610, %v1670
    %v1672 = vmul.f32 %v1664, %v1671
    %v1673 = vmul.f32 %v1665, %v1671
    %v1674 = vmul.f32 %v1666, %v1671
    %v1675 = vmul.f32 %v1667, %v1671
    %v1676 = vlaneseq
    %v1677 = vshrl.u32 %v1676, 7
    %v1678 = vsub.s32 0, %v1677
    %v1679 = vrot.slane %v1611, %v1678
    %v1680 = vadd.f32 %v1672, %v1679
    %v1681 = vadd.f32 %v1673, %v1679
    %v1682 = vadd.f32 %v1674, %v1679
    %v1683 = vadd.f32 %v1675, %v1679
    %v1684 = vpack.c.bf16 %v1681, %v1680
    %v1685 = vpack.c.bf16 %v1683, %v1682
    %v1686 = vld [vmem:[#allocation10 + $0x70] sm:$0xf]
    %v1687 = vld [vmem:[#allocation10 + $0x74] sm:$0xf]
    %v1688 = vld [vmem:[#allocation10 + $0x78] sm:$0xf]
    %v1689 = vld [vmem:[#allocation10 + $0x7c] sm:$0xf]
    %v1690 = vld [vmem:[#allocation11 + $0xc] sm:$0x1]
    %v1691 = vlaneseq
    %v1692 = vshrl.u32 %v1691, 7
    %v1693 = vsub.s32 0, %v1692
    %v1694 = vrot.slane %v1690, %v1693
    %v1699 = vunpack.c.l.b16 %v1686
    %v1700 = vunpack.c.l.b16 %v1687
    %v1701 = vunpack.c.l.b16 %v1688
    %v1702 = vunpack.c.l.b16 %v1689
    %v1703 = vpack.c.b16 %v1700, %v1699
    %v1704 = vpack.c.b16 %v1702, %v1701
    %v1708 = vsel %vm94, %v1684, 0
    %v1711 = vsel %vm94, %v1685, 0
    %1713 = vmatprep.subr.bf16.mxu0 0
    %1714 = vmatpush1.bf16.msra.mxu0 %v1703
    %1715 = vmatprep.subr.bf16.mxu0 0
    %1716 = vmatpush1.bf16.msra.mxu0 %v1704
    %1717 = vmatprep.subr.bf16.mxu0 0
    %1718 = vmatpush1.bf16.msra.mxu0 0
    %1719 = vmatprep.subr.bf16.mxu0 0
    %1720 = vmatpush1.bf16.msra.mxu0 0
    %1721 = vmatprep.subr.bf16.mxu0 0
    %1722 = vmatpush1.bf16.msra.mxu0 0
    %1723 = vmatprep.subr.bf16.mxu0 0
    %1724 = vmatpush1.bf16.msra.mxu0 0
    %1725 = vmatprep.subr.bf16.mxu0 0
    %1726 = vmatpush1.bf16.msra.mxu0 0
    %1727 = vmatprep.subr.bf16.mxu0 0
    %1728 = vmatpush1.bf16.msra.mxu0 0
    %1729 = vmatprep.subr.bf16.mxu0 0
    %1730 = vmatpush1.bf16.msra.mxu0 0
    %1731 = vmatprep.subr.bf16.mxu0 0
    %1732 = vmatpush1.bf16.msra.mxu0 0
    %1733 = vmatprep.subr.bf16.mxu0 0
    %1734 = vmatpush1.bf16.msra.mxu0 0
    %1735 = vmatprep.subr.bf16.mxu0 0
    %1736 = vmatpush1.bf16.msra.mxu0 0
    %1737 = vmatprep.subr.bf16.mxu0 0
    %1738 = vmatpush1.bf16.msra.mxu0 0
    %1739 = vmatprep.subr.bf16.mxu0 0
    %1740 = vmatpush1.bf16.msra.mxu0 0
    %1741 = vmatprep.subr.bf16.mxu0 0
    %1742 = vmatpush1.bf16.msra.mxu0 0
    %1743 = vmatprep.subr.bf16.mxu0 0
    %1744 = vmatpush1.bf16.msra.mxu0 0
    %1745 = vmatprep.mubr.bf16.mxu0 0
    %1746 = vmatmul.mubr.bf16.gmra.mrb[0].mxu0 %v1708
    %v1747 = vpop.f32.mrb[0].mxu0
    %v1748 = vadd.f32 %v1694, %v1747
    %v1749 = vpop.f32.mrb[0].mxu0
    %v1750 = vpop.f32.mrb[0].mxu0
    %v1751 = vadd.f32 %v1694, %v1750
    %v1752 = vpop.f32.mrb[0].mxu0
    %1753 = vmatprep.mubr.bf16.mxu0 0
    %1754 = vmatmul.mubr.bf16.gmra.mrb[0].mxu0 %v1711
    %v1755 = vpop.f32.mrb[0].mxu0
    %v1756 = vadd.f32 %v1694, %v1755
    %v1757 = vpop.f32.mrb[0].mxu0
    %v1758 = vpop.f32.mrb[0].mxu0
    %v1759 = vadd.f32 %v1694, %v1758
    %v1760 = vpop.f32.mrb[0].mxu0
    %1761 = vdwg.mxu0
    %v1762 = vmul.f32 %v1748, %v1748
    %v1763 = vmul.f32 %v1751, %v1751
    %v1764 = vmul.f32 %v1756, %v1756
    %v1765 = vmul.f32 %v1759, %v1759
    %v1766 = vmul.f32 %v1748, %v1762
    %v1767 = vmul.f32 %v1751, %v1763
    %v1768 = vmul.f32 %v1756, %v1764
    %v1769 = vmul.f32 %v1759, %v1765
    %v1770 = vmul.f32 %v1766, 0.044715
    %v1771 = vmul.f32 %v1767, 0.044715
    %v1772 = vmul.f32 %v1768, 0.044715
    %v1773 = vmul.f32 %v1769, 0.044715
    %v1774 = vadd.f32 %v1748, %v1770
    %v1775 = vadd.f32 %v1751, %v1771
    %v1776 = vadd.f32 %v1756, %v1772
    %v1777 = vadd.f32 %v1759, %v1773
    %v1778 = vmul.f32 %v1774, 0.7978846
    %v1779 = vmul.f32 %v1775, 0.7978846
    %v1780 = vmul.f32 %v1776, 0.7978846
    %v1781 = vmul.f32 %v1777, 0.7978846
    %v1782 = vtanh.pop %v1778
    %v1783 = vtanh.pop %v1779
    %v1784 = vtanh.pop %v1780
    %v1785 = vtanh.pop %v1781
    %v1786 = vadd.f32 %v1782, 1.0
    %v1787 = vadd.f32 %v1783, 1.0
    %v1788 = vadd.f32 %v1784, 1.0
    %v1789 = vadd.f32 %v1785, 1.0
    %v1790 = vmul.f32 %v1786, 0.5
    %v1791 = vmul.f32 %v1787, 0.5
    %v1792 = vmul.f32 %v1788, 0.5
    %v1793 = vmul.f32 %v1789, 0.5
    %v1794 = vmul.f32 %v1748, %v1790
    %v1795 = vmul.f32 %v1751, %v1791
    %v1796 = vmul.f32 %v1756, %v1792
    %v1797 = vmul.f32 %v1759, %v1793
    %v1798 = vld [vmem:[#allocation10 + $0x80] sm:$0xf]
    %v1799 = vld [vmem:[#allocation10 + $0x84] sm:$0xf]
    %v1800 = vld [vmem:[#allocation10 + $0x88] sm:$0xf]
    %v1801 = vld [vmem:[#allocation10 + $0x8c] sm:$0xf]
    %v1802 = vld [vmem:[#allocation10 + $0x90] sm:$0xf]
    %v1803 = vld [vmem:[#allocation10 + $0x94] sm:$0xf]
    %v1804 = vld [vmem:[#allocation10 + $0x98] sm:$0xf]
    %v1805 = vld [vmem:[#allocation10 + $0x9c] sm:$0xf]
    %v1806 = vld [vmem:[#allocation11 + $0xd] sm:$0x1]
    %v1807 = vpack.c.bf16 %v1795, %v1794
    %v1808 = vpack.c.bf16 %v1797, %v1796
    %v1809 = vlaneseq
    %v1810 = vshrl.u32 %v1809, 7
    %v1811 = vsub.s32 0, %v1810
    %v1812 = vrot.slane %v1806, %v1811
    %v1821 = vunpack.c.l.b16 %v1798
    %v1822 = vunpack.c.l.b16 %v1799
    %v1823 = vunpack.c.l.b16 %v1800
    %v1824 = vunpack.c.l.b16 %v1801
    %v1825 = vunpack.c.l.b16 %v1802
    %v1826 = vunpack.c.l.b16 %v1803
    %v1827 = vunpack.c.l.b16 %v1804
    %v1828 = vunpack.c.l.b16 %v1805
    %v1829 = vpack.c.b16 %v1822, %v1821
    %v1830 = vpack.c.b16 %v1824, %v1823
    %v1831 = vpack.c.b16 %v1826, %v1825
    %v1832 = vpack.c.b16 %v1828, %v1827
    %v1838 = vsel %vm936, %v1807, 0
    %v1841 = vsel %vm936, %v1808, 0
    %1843 = vmatprep.subr.bf16.mxu0 0
    %1844 = vmatpush1.bf16.msra.mxu0 %v1829
    %1845 = vmatprep.subr.bf16.mxu0 0
    %1846 = vmatpush1.bf16.msra.mxu0 %v1830
    %1847 = vmatprep.subr.bf16.mxu0 0
    %1848 = vmatpush1.bf16.msra.mxu0 %v1831
    %1849 = vmatprep.subr.bf16.mxu0 0
    %1850 = vmatpush1.bf16.msra.mxu0 %v1832
    %1851 = vmatprep.subr.bf16.mxu0 0
    %1852 = vmatpush1.bf16.msra.mxu0 0
    %1853 = vmatprep.subr.bf16.mxu0 0
    %1854 = vmatpush1.bf16.msra.mxu0 0
    %1855 = vmatprep.subr.bf16.mxu0 0
    %1856 = vmatpush1.bf16.msra.mxu0 0
    %1857 = vmatprep.subr.bf16.mxu0 0
    %1858 = vmatpush1.bf16.msra.mxu0 0
    %1859 = vmatprep.subr.bf16.mxu0 0
    %1860 = vmatpush1.bf16.msra.mxu0 0
    %1861 = vmatprep.subr.bf16.mxu0 0
    %1862 = vmatpush1.bf16.msra.mxu0 0
    %1863 = vmatprep.subr.bf16.mxu0 0
    %1864 = vmatpush1.bf16.msra.mxu0 0
    %1865 = vmatprep.subr.bf16.mxu0 0
    %1866 = vmatpush1.bf16.msra.mxu0 0
    %1867 = vmatprep.subr.bf16.mxu0 0
    %1868 = vmatpush1.bf16.msra.mxu0 0
    %1869 = vmatprep.subr.bf16.mxu0 0
    %1870 = vmatpush1.bf16.msra.mxu0 0
    %1871 = vmatprep.subr.bf16.mxu0 0
    %1872 = vmatpush1.bf16.msra.mxu0 0
    %1873 = vmatprep.subr.bf16.mxu0 0
    %1874 = vmatpush1.bf16.msra.mxu0 0
    %1875 = vmatprep.mubr.bf16.mxu0 0
    %1876 = vmatmul.mubr.bf16.gmra.mrb[0].mxu0 %v1838
    %v1877 = vpop.f32.mrb[0].mxu0
    %v1878 = vadd.f32 %v1812, %v1877
    %v1879 = vpop.f32.mrb[0].mxu0
    %v1880 = vpop.f32.mrb[0].mxu0
    %v1881 = vadd.f32 %v1812, %v1880
    %v1882 = vpop.f32.mrb[0].mxu0
    %1883 = vmatprep.mubr.bf16.mxu0 0
    %1884 = vmatmul.mubr.bf16.gmra.mrb[0].mxu0 %v1841
    %v1885 = vpop.f32.mrb[0].mxu0
    %v1886 = vadd.f32 %v1812, %v1885
    %v1887 = vpop.f32.mrb[0].mxu0
    %v1888 = vpop.f32.mrb[0].mxu0
    %v1889 = vadd.f32 %v1812, %v1888
    %v1890 = vpop.f32.mrb[0].mxu0
    %1891 = vdwg.mxu0
    %v1892 = vld [vmem:[#allocation11 + $0xe] sm:$0x1]
    %v1893 = vld [vmem:[#allocation11 + $0xf] sm:$0x1]
    %v1894 = vadd.f32 %v1680, %v1878
    %v1895 = vadd.f32 %v1681, %v1881
    %v1896 = vadd.f32 %v1682, %v1886
    %v1897 = vadd.f32 %v1683, %v1889
    %v1898 = vsel %vm94, %v1894, 0.0
    %1899 = vadd.xlane.f32.xlu0 %v1898
    %v1900 = vpop.xlane.xlu0 %1899
    %v1901 = vsel %vm94, %v1895, 0.0
    %1902 = vadd.xlane.f32.xlu0 %v1901
    %v1903 = vpop.xlane.xlu0 %1902
    %v1904 = vsel %vm94, %v1896, 0.0
    %1905 = vadd.xlane.f32.xlu0 %v1904
    %v1906 = vpop.xlane.xlu0 %1905
    %v1907 = vsel %vm94, %v1897, 0.0
    %1908 = vadd.xlane.f32.xlu0 %v1907
    %v1909 = vpop.xlane.xlu0 %1908
    %v1910 = vmul.f32 %v1900, %v107
    %v1911 = vmul.f32 %v1903, %v107
    %v1912 = vmul.f32 %v1906, %v107
    %v1913 = vmul.f32 %v1909, %v107
    %v1914 = vsub.f32 %v1894, %v1910
    %v1915 = vsub.f32 %v1895, %v1911
    %v1916 = vsub.f32 %v1896, %v1912
    %v1917 = vsub.f32 %v1897, %v1913
    %v1918 = vmul.f32 %v1914, %v1914
    %v1919 = vmul.f32 %v1915, %v1915
    %v1920 = vmul.f32 %v1916, %v1916
    %v1921 = vmul.f32 %v1917, %v1917
    %v1922 = vsel %vm94, %v1918, 0.0
    %1923 = vadd.xlane.f32.xlu0 %v1922
    %v1924 = vpop.xlane.xlu0 %1923
    %v1925 = vsel %vm94, %v1919, 0.0
    %1926 = vadd.xlane.f32.xlu0 %v1925
    %v1927 = vpop.xlane.xlu0 %1926
    %v1928 = vsel %vm94, %v1920, 0.0
    %1929 = vadd.xlane.f32.xlu0 %v1928
    %v1930 = vpop.xlane.xlu0 %1929
    %v1931 = vsel %vm94, %v1921, 0.0
    %1932 = vadd.xlane.f32.xlu0 %v1931
    %v1933 = vpop.xlane.xlu0 %1932
    %v1934 = vmul.f32 %v1924, %v107
    %v1935 = vmul.f32 %v1927, %v107
    %v1936 = vmul.f32 %v1930, %v107
    %v1937 = vmul.f32 %v1933, %v107
    %v1938 = vadd.f32 %v1934, 1e-12
    %v1939 = vadd.f32 %v1935, 1e-12
    %v1940 = vadd.f32 %v1936, 1e-12
    %v1941 = vadd.f32 %v1937, 1e-12
    %v1942 = vrsqrt.pop %v1938
    %v1943 = vrsqrt.pop %v1939
    %v1944 = vrsqrt.pop %v1940
    %v1945 = vrsqrt.pop %v1941
    %v1946 = vmul.f32 %v1914, %v1942
    %v1947 = vmul.f32 %v1915, %v1943
    %v1948 = vmul.f32 %v1916, %v1944
    %v1949 = vmul.f32 %v1917, %v1945
    %v1950 = vlaneseq
    %v1951 = vshrl.u32 %v1950, 7
    %v1952 = vsub.s32 0, %v1951
    %v1953 = vrot.slane %v1892, %v1952
    %v1954 = vmul.f32 %v1946, %v1953
    %v1955 = vmul.f32 %v1947, %v1953
    %v1956 = vmul.f32 %v1948, %v1953
    %v1957 = vmul.f32 %v1949, %v1953
    %v1958 = vlaneseq
    %v1959 = vshrl.u32 %v1958, 7
    %v1960 = vsub.s32 0, %v1959
    %v1961 = vrot.slane %v1893, %v1960
    %v1962 = vadd.f32 %v1954, %v1961
    %v1963 = vadd.f32 %v1955, %v1961
    %v1964 = vadd.f32 %v1956, %v1961
    %v1965 = vadd.f32 %v1957, %v1961
    %v1966 = vpack.c.bf16 %v1963, %v1962
    %v1967 = vpack.c.bf16 %v1965, %v1964
    %v1968 = vlaneseq
    %v1969 = vshrl.u32 %v1968, 7
    %v1970 = vlaneseq
    %v1971 = vand.u32 %v1970, 127
    %vm1972 = vcmp.eq.s32.totalorder %v1969, 0
    %s1973 = sld [smem:[#allocation3]]
    %v1974 = vstv %s1973
    %vm1975 = vcmp.eq.s32.totalorder %v1971, %v1974
    %vm1976 = vmand %vm1972, %vm1975
    %v1977 = vsel %vm1976, 1.0, 0.0
    %v1978 = vadd.f32 %v1977, 0.0
    %vm1979 = vcmp.eq.s32.totalorder %v1969, 2
    %s1980 = sld [smem:[#allocation4]]
    %v1981 = vstv %s1980
    %vm1982 = vcmp.eq.s32.totalorder %v1971, %v1981
    %vm1983 = vmand %vm1979, %vm1982
    %v1984 = vsel %vm1983, 1.0, 0.0
    %v1985 = vadd.f32 %v1978, %v1984
    %vm1986 = vcmp.eq.s32.totalorder %v1969, 1
    %s1987 = sld [smem:[#allocation3 + $0x1]]
    %s1988 = sadd.s32 %s1987, 16
    %v1989 = vstv %s1988
    %vm1990 = vcmp.eq.s32.totalorder %v1971, %v1989
    %vm1991 = vmand %vm1986, %vm1990
    %v1992 = vsel %vm1991, 1.0, 0.0
    %v1993 = vadd.f32 %v1985, %v1992
    %vm1994 = vcmp.eq.s32.totalorder %v1969, 3
    %s1995 = sld [smem:[#allocation4 + $0x1]]
    %s1996 = sadd.s32 %s1995, 16
    %v1997 = vstv %s1996
    %vm1998 = vcmp.eq.s32.totalorder %v1971, %v1997
    %vm1999 = vmand %vm1994, %vm1998
    %v2000 = vsel %vm1999, 1.0, 0.0
    %v2001 = vadd.f32 %v1993, %v2000
    %v2002 = vpack.c.bf16 %v2001, %v2001
    %v2004 = vsel %vm94, %v2002, 0
    %2006 = vmatprep.subr.bf16.mxu0 0
    %2007 = vmatpush1.bf16.msra.mxu0 %v1966
    %2008 = vmatprep.subr.bf16.mxu0 0
    %2009 = vmatpush1.bf16.msra.mxu0 %v1967
    %2010 = vmatprep.subr.bf16.mxu0 0
    %2011 = vmatpush1.bf16.msra.mxu0 0
    %2012 = vmatprep.subr.bf16.mxu0 0
    %2013 = vmatpush1.bf16.msra.mxu0 0
    %2014 = vmatprep.subr.bf16.mxu0 0
    %2015 = vmatpush1.bf16.msra.mxu0 0
    %2016 = vmatprep.subr.bf16.mxu0 0
    %2017 = vmatpush1.bf16.msra.mxu0 0
    %2018 = vmatprep.subr.bf16.mxu0 0
    %2019 = vmatpush1.bf16.msra.mxu0 0
    %2020 = vmatprep.subr.bf16.mxu0 0
    %2021 = vmatpush1.bf16.msra.mxu0 0
    %2022 = vmatprep.subr.bf16.mxu0 0
    %2023 = vmatpush1.bf16.msra.mxu0 0
    %2024 = vmatprep.subr.bf16.mxu0 0
    %2025 = vmatpush1.bf16.msra.mxu0 0
    %2026 = vmatprep.subr.bf16.mxu0 0
    %2027 = vmatpush1.bf16.msra.mxu0 0
    %2028 = vmatprep.subr.bf16.mxu0 0
    %2029 = vmatpush1.bf16.msra.mxu0 0
    %2030 = vmatprep.subr.bf16.mxu0 0
    %2031 = vmatpush1.bf16.msra.mxu0 0
    %2032 = vmatprep.subr.bf16.mxu0 0
    %2033 = vmatpush1.bf16.msra.mxu0 0
    %2034 = vmatprep.subr.bf16.mxu0 0
    %2035 = vmatpush1.bf16.msra.mxu0 0
    %2036 = vmatprep.subr.bf16.mxu0 0
    %2037 = vmatpush1.bf16.msra.mxu0 0
    %2038 = vmatprep.mubr.bf16.mxu0 0
    %2039 = vmatmul.mubr.bf16.gmra.mrb[0].mxu0 %v2004
    %v2040 = vpop.f32.mrb[0].mxu0
    %v2041 = vadd.f32 0.0, %v2040
    %v2042 = vpop.f32.mrb[0].mxu0
    %v2043 = vpop.f32.mrb[0].mxu0
    %v2044 = vpop.f32.mrb[0].mxu0
    %2045 = vdwg.mxu0
    %v2047 = vrot.slane %v2041, 2
    %2048 = vrot.lane.b32.xlu0 %v2047, 32
    %v2049 = vpop.permute.xlu0 %2048
    %v2051 = vsel %vm94, %v2041, %v2049
    %v2052 = vpack.c.bf16 %v2051, %v2051
    %v2053 = vld [vmem:[#allocation10 + $0xa0] sm:$0xf]
    %v2054 = vld [vmem:[#allocation10 + $0xa4] sm:$0xf]
    %v2055 = vld [vmem:[#allocation10 + $0xa8] sm:$0xf]
    %v2056 = vld [vmem:[#allocation10 + $0xac] sm:$0xf]
    %v2057 = vld [vmem:[#allocation10 + $0xb0] sm:$0xf]
    %v2058 = vld [vmem:[#allocation10 + $0xb4] sm:$0xf]
    %v2059 = vld [vmem:[#allocation10 + $0xb8] sm:$0xf]
    %v2060 = vld [vmem:[#allocation10 + $0xbc] sm:$0xf]
    %v2061 = vld [vmem:[#allocation11 + $0x12] sm:$0x1]
    %v2062 = vlaneseq
    %v2063 = vshrl.u32 %v2062, 7
    %v2064 = vsub.s32 0, %v2063
    %v2065 = vrot.slane %v2061, %v2064
    %v2074 = vunpack.c.l.b16 %v2053
    %v2075 = vunpack.c.l.b16 %v2054
    %v2076 = vunpack.c.l.b16 %v2055
    %v2077 = vunpack.c.l.b16 %v2056
    %v2078 = vunpack.c.l.b16 %v2057
    %v2079 = vunpack.c.l.b16 %v2058
    %v2080 = vunpack.c.l.b16 %v2059
    %v2081 = vunpack.c.l.b16 %v2060
    %v2082 = vpack.c.b16 %v2075, %v2074
    %v2083 = vpack.c.b16 %v2077, %v2076
    %v2084 = vpack.c.b16 %v2079, %v2078
    %v2085 = vpack.c.b16 %v2081, %v2080
    %v2091 = vsel %vm936, %v2052, 0
    %2093 = vmatprep.subr.bf16.mxu0 0
    %2094 = vmatpush1.bf16.msra.mxu0 %v2082
    %2095 = vmatprep.subr.bf16.mxu0 0
    %2096 = vmatpush1.bf16.msra.mxu0 %v2083
    %2097 = vmatprep.subr.bf16.mxu0 0
    %2098 = vmatpush1.bf16.msra.mxu0 %v2084
    %2099 = vmatprep.subr.bf16.mxu0 0
    %2100 = vmatpush1.bf16.msra.mxu0 %v2085
    %2101 = vmatprep.subr.bf16.mxu0 0
    %2102 = vmatpush1.bf16.msra.mxu0 0
    %2103 = vmatprep.subr.bf16.mxu0 0
    %2104 = vmatpush1.bf16.msra.mxu0 0
    %2105 = vmatprep.subr.bf16.mxu0 0
    %2106 = vmatpush1.bf16.msra.mxu0 0
    %2107 = vmatprep.subr.bf16.mxu0 0
    %2108 = vmatpush1.bf16.msra.mxu0 0
    %2109 = vmatprep.subr.bf16.mxu0 0
    %2110 = vmatpush1.bf16.msra.mxu0 0
    %2111 = vmatprep.subr.bf16.mxu0 0
    %2112 = vmatpush1.bf16.msra.mxu0 0
    %2113 = vmatprep.subr.bf16.mxu0 0
    %2114 = vmatpush1.bf16.msra.mxu0 0
    %2115 = vmatprep.subr.bf16.mxu0 0
    %2116 = vmatpush1.bf16.msra.mxu0 0
    %2117 = vmatprep.subr.bf16.mxu0 0
    %2118 = vmatpush1.bf16.msra.mxu0 0
    %2119 = vmatprep.subr.bf16.mxu0 0
    %2120 = vmatpush1.bf16.msra.mxu0 0
    %2121 = vmatprep.subr.bf16.mxu0 0
    %2122 = vmatpush1.bf16.msra.mxu0 0
    %2123 = vmatprep.subr.bf16.mxu0 0
    %2124 = vmatpush1.bf16.msra.mxu0 0
    %2125 = vmatprep.mubr.bf16.mxu0 0
    %2126 = vmatmul.mubr.bf16.gmra.mrb[0].mxu0 %v2091
    %v2127 = vpop.f32.mrb[0].mxu0
    %v2128 = vadd.f32 %v2065, %v2127
    %v2129 = vpop.f32.mrb[0].mxu0
    %v2130 = vpop.f32.mrb[0].mxu0
    %v2131 = vpop.f32.mrb[0].mxu0
    %2132 = vdwg.mxu0
    %2133 = vst [vmem:[#allocation13] sm:$0x3] %v2128
    // Predicated region
    $region34: #{tpu_custom_call.1} parent=1 // pred_check
      _
    $region35: #{tpu_custom_call.1} parent=1 // pred_check_branch
      %2135 = sbr.rel (0) target = $region37
    $region36: #{tpu_custom_call.1} parent=1 // pred_region
      %s2137 = ssub.s32 32, 32
      %2138 = vsyncadd [#allocation7], %s2137
      %s2140 = sshll.u32 [#allocation13], 4
      %s2141 = int_to_ptr.vmem [resolvable:$true] %s2140
      %2143 = dma.vmem_to_hbm [thread:$0]  %s2141, 32, %s6, [#allocation7]
    $region37: #{tpu_custom_call.1} parent=1 // pred_fallthru
      _
    // Predicated region
    $region38: #{tpu_custom_call.1} parent=1 // pred_check
      _
    $region39: #{tpu_custom_call.1} parent=1 // pred_check_branch
      %2145 = sbr.rel (0) target = $region41
    $region40: #{tpu_custom_call.1} parent=1 // pred_region
      %2146 = dma.done [#allocation7], 32
    $region41: #{tpu_custom_call.1} parent=1 // pred_fallthru
      _
    %2147 = vsyncpa [#allocation6], 1
    %2148 = vsyncpa [#allocation9], 1
    %2149 = vsyncpa [#allocation12], 1
    %2150 = vsyncpa [#allocation7], 1

</llo_original>
